<compile_context>
chip_gen: v7x
topology: tpu7x:2x2x1
jax: 0.10.0
libtpu: 0.0.40
codegen_flags: <defaults>
</compile_context>

<pallas_src>
import functools

import jax
import jax.numpy as jnp
from jax.experimental import pallas as pl
from jax.experimental.pallas import tpu as pltpu


def _perceiver_attention_kernel(
    # inputs
    x_ref, lat_ref,
    lnm_w_ref, lnm_b_ref, lnl_w_ref, lnl_b_ref,
    wq_ref, bq_ref, wk_ref, bk_ref, wv_ref, bv_ref, wout_ref, bout_ref,
    # output
    o_ref,
    # scratch
    xn_scr, ln_scr, acc_scr,
    *, scale, eps,
):
    h = pl.program_id(1)
    bt, m, dim = x_ref.shape
    n = lat_ref.shape[1]
    dim_head = wq_ref.shape[2]
    cd = wq_ref.dtype                       # MXU compute dtype (f32 or bf16)

    # ---- once per batch block: LayerNorms (f32 stats) + accumulator init ----
    @pl.when(h == 0)
    def _():
        def layernorm(t, w, b):
            t = t.astype(jnp.float32)
            mu = jnp.mean(t, axis=-1, keepdims=True)
            var = jnp.mean((t - mu) ** 2, axis=-1, keepdims=True)
            return (t - mu) * jax.lax.rsqrt(var + eps) * w + b

        xn_scr[...] = layernorm(x_ref[...], lnm_w_ref[...], lnm_b_ref[...]).astype(xn_scr.dtype)
        ln_scr[...] = layernorm(lat_ref[...], lnl_w_ref[...], lnl_b_ref[...]).astype(ln_scr.dtype)
        acc_scr[...] = jnp.zeros_like(acc_scr)

    # ---- per-head projections: plain 2D MXU matmuls with f32 accumulation ----
    xf = xn_scr[...].reshape(bt * m, dim)   # normalized media tokens
    lf = ln_scr[...].reshape(bt * n, dim)   # normalized latent tokens

    wq = wq_ref[0]                          # (dim, dim_head)
    wk = wk_ref[0]
    wv = wv_ref[0]

    q = (jnp.dot(lf, wq, preferred_element_type=jnp.float32) + bq_ref[0]) * scale
    k_x = jnp.dot(xf, wk, preferred_element_type=jnp.float32) + bk_ref[0]
    k_l = jnp.dot(lf, wk, preferred_element_type=jnp.float32) + bk_ref[0]
    v_x = jnp.dot(xf, wv, preferred_element_type=jnp.float32) + bv_ref[0]
    v_l = jnp.dot(lf, wv, preferred_element_type=jnp.float32) + bv_ref[0]

    q3 = q.reshape(bt, n, dim_head).astype(cd)
    kx3 = k_x.reshape(bt, m, dim_head).astype(cd)
    kl3 = k_l.reshape(bt, n, dim_head).astype(cd)
    vx3 = v_x.reshape(bt, m, dim_head).astype(cd)
    vl3 = v_l.reshape(bt, n, dim_head).astype(cd)

    # ---- attention: softmax over concat(media, latents) without a concat ----
    sim_x = jnp.einsum("bid,bjd->bij", q3, kx3, preferred_element_type=jnp.float32)
    sim_l = jnp.einsum("bid,bjd->bij", q3, kl3, preferred_element_type=jnp.float32)

    row_max = jnp.maximum(jnp.max(sim_x, axis=-1, keepdims=True),
                          jnp.max(sim_l, axis=-1, keepdims=True))
    p_x = jnp.exp(sim_x - row_max)
    p_l = jnp.exp(sim_l - row_max)
    denom = jnp.sum(p_x, axis=-1, keepdims=True) + jnp.sum(p_l, axis=-1, keepdims=True)
    inv = pl.reciprocal(denom, approx=True)

    pv = (jnp.einsum("bij,bjd->bid", p_x.astype(cd), vx3, preferred_element_type=jnp.float32)
          + jnp.einsum("bij,bjd->bid", p_l.astype(cd), vl3, preferred_element_type=jnp.float32))
    out_h = (pv * inv).reshape(bt * n, dim_head).astype(cd)

    # ---- output projection for this head, accumulated in f32 ----
    acc_scr[...] += jnp.dot(out_h, wout_ref[0],
                            preferred_element_type=jnp.float32).reshape(bt, n, dim)

    @pl.when(h == pl.num_programs(1) - 1)
    def _():
        o_ref[...] = (acc_scr[...] + bout_ref[...]).astype(o_ref.dtype)


def perceiver_attention(x, latents, params, *, heads, dim_head,
                        compute_dtype=None, block_b=None,
                        vmem_limit_bytes=48 * 1024 * 1024):
    """Forward pass of PerceiverAttention via a single Pallas TPU kernel."""
    (lnm_w, lnm_b, lnl_w, lnl_b, wq, bq, wkv, bkv, wout, bout) = params
    b, m, dim = x.shape
    n = latents.shape[1]
    inner = heads * dim_head
    scale = dim_head ** (-0.5)

    if compute_dtype is None:
        compute_dtype = x.dtype
    compute_dtype = jnp.dtype(compute_dtype)

    if block_b is None:
        block_b = max(d for d in range(1, min(b, 8) + 1) if b % d == 0)
    assert b % block_b == 0
    grid = (b // block_b, heads)

    # ---- host-side (free) re-layout of parameters into per-head tiles ----
    def per_head_w(w):                      # (dim, inner) -> (heads, dim, dim_head)
        return w.reshape(dim, heads, dim_head).transpose(1, 0, 2).astype(compute_dtype)

    def per_head_b(bvec):                   # (inner,) -> (heads, 1, dim_head), f32
        return jnp.asarray(bvec).reshape(heads, 1, dim_head).astype(jnp.float32)

    wq_h = per_head_w(wq)
    wk_h = per_head_w(wkv[:, :inner])
    wv_h = per_head_w(wkv[:, inner:])
    bq_h = per_head_b(bq)
    bk_h = per_head_b(bkv[:inner])
    bv_h = per_head_b(bkv[inner:])
    wout_h = wout.reshape(heads, dim_head, dim).astype(compute_dtype)
    bout2 = jnp.asarray(bout).reshape(1, dim).astype(jnp.float32)
    lnm_w2 = jnp.asarray(lnm_w).reshape(1, dim).astype(jnp.float32)
    lnm_b2 = jnp.asarray(lnm_b).reshape(1, dim).astype(jnp.float32)
    lnl_w2 = jnp.asarray(lnl_w).reshape(1, dim).astype(jnp.float32)
    lnl_b2 = jnp.asarray(lnl_b).reshape(1, dim).astype(jnp.float32)

    kernel = functools.partial(_perceiver_attention_kernel, scale=scale, eps=1e-5)

    def batch_block(seq):
        return pl.BlockSpec((block_b, seq, dim), lambda i, h: (i, 0, 0))

    def shared2d(shape):
        return pl.BlockSpec(shape, lambda i, h: (0, 0))

    def head3d(shape):
        return pl.BlockSpec((1,) + shape, lambda i, h: (h, 0, 0))

    in_specs = [
        batch_block(m),                                     # x
        batch_block(n),                                     # latents
        shared2d((1, dim)), shared2d((1, dim)),             # norm_media  w, b
        shared2d((1, dim)), shared2d((1, dim)),             # norm_latents w, b
        head3d((dim, dim_head)), head3d((1, dim_head)),     # to_q  W_h, b_h
        head3d((dim, dim_head)), head3d((1, dim_head)),     # to_k  W_h, b_h
        head3d((dim, dim_head)), head3d((1, dim_head)),     # to_v  W_h, b_h
        head3d((dim_head, dim)),                            # to_out W_h
        shared2d((1, dim)),                                 # to_out bias
    ]

    flops = 2 * b * (
        n * dim * inner                 # q projection
        + (m + n) * dim * 2 * inner     # kv projection
        + 2 * n * (m + n) * inner       # q·kᵀ and attn·v over all heads
        + n * inner * dim               # output projection
    )
    weight_arrays = (wq_h, wk_h, wv_h, wout_h, bq_h, bk_h, bv_h,
                     bout2, lnm_w2, lnm_b2, lnl_w2, lnl_b2)
    bytes_accessed = int(
        x.size * x.dtype.itemsize
        + latents.size * latents.dtype.itemsize
        + sum(a.size * a.dtype.itemsize for a in weight_arrays)
        + b * n * dim * x.dtype.itemsize)
    cost = pl.CostEstimate(flops=int(flops),
                           transcendentals=int(b * heads * n * (m + n)),
                           bytes_accessed=bytes_accessed)

    return pl.pallas_call(
        kernel,
        out_shape=jax.ShapeDtypeStruct((b, n, dim), x.dtype),
        grid=grid,
        in_specs=in_specs,
        out_specs=pl.BlockSpec((block_b, n, dim), lambda i, h: (i, 0, 0)),
        scratch_shapes=[
            pltpu.VMEM((block_b, m, dim), compute_dtype),   # cached LN(media)
            pltpu.VMEM((block_b, n, dim), compute_dtype),   # cached LN(latents)
            pltpu.VMEM((block_b, n, dim), jnp.float32),     # output accumulator
        ],
        compiler_params=pltpu.CompilerParams(
            dimension_semantics=("parallel", "arbitrary"),
            vmem_limit_bytes=vmem_limit_bytes,
        ),
        cost_estimate=cost,
    )(x, latents, lnm_w2, lnm_b2, lnl_w2, lnl_b2,
      wq_h, bq_h, wk_h, bk_h, wv_h, bv_h, wout_h, bout2)


def perceiver_attention_ref(x, latents, params, *, heads, dim_head):
    """Pure-JAX reference mirroring the PyTorch forward."""
    (lnm_w, lnm_b, lnl_w, lnl_b, wq, bq, wkv, bkv, wout, bout) = params
    eps = 1e-5
    inner = heads * dim_head
    scale = dim_head ** (-0.5)

    def ln(t, w, b):
        mu = jnp.mean(t, axis=-1, keepdims=True)
        var = jnp.mean((t - mu) ** 2, axis=-1, keepdims=True)
        return (t - mu) / jnp.sqrt(var + eps) * w + b

    xn = ln(x, lnm_w, lnm_b)
    latn = ln(latents, lnl_w, lnl_b)
    q = latn @ wq + bq
    kv_in = jnp.concatenate([xn, latn], axis=-2)
    kv = kv_in @ wkv + bkv
    k, v = kv[..., :inner], kv[..., inner:]

    def split_heads(t):  # b n (h d) -> b h n d
        b_, s_, _ = t.shape
        return t.reshape(b_, s_, heads, dim_head).transpose(0, 2, 1, 3)

    q, k, v = split_heads(q) * scale, split_heads(k), split_heads(v)
    sim = jnp.einsum("bhid,bhjd->bhij", q, k)
    sim = sim - jnp.max(sim, axis=-1, keepdims=True)
    attn = jax.nn.softmax(sim, axis=-1)
    out = jnp.einsum("bhij,bhjd->bhid", attn, v)
    out = out.transpose(0, 2, 1, 3).reshape(x.shape[0], latents.shape[1], inner)
    return out @ wout + bout


def make_params(key, dim, heads, dim_head):
    inner = heads * dim_head
    ks = jax.random.split(key, 8)
    lnm_w = jnp.ones((dim,), jnp.float32) + 0.05 * jax.random.normal(ks[0], (dim,), jnp.float32)
    lnm_b = 0.05 * jax.random.normal(ks[1], (dim,), jnp.float32)
    lnl_w = jnp.ones((dim,), jnp.float32)
    lnl_b = jnp.zeros((dim,), jnp.float32)
    # NOTE: the PyTorch module zero-inits to_q/to_kv weights; we use small
    # random values here so the correctness check exercises the attention path.
    wq = 0.05 * jax.random.normal(ks[2], (dim, inner), jnp.float32)
    bq = 0.1 * jax.random.normal(ks[3], (inner,), jnp.float32)
    wkv = 0.05 * jax.random.normal(ks[4], (dim, 2 * inner), jnp.float32)
    bkv = 0.1 * jax.random.normal(ks[5], (2 * inner,), jnp.float32)
    wout = 0.05 * jax.random.normal(ks[6], (inner, dim), jnp.float32)
    bout = 0.1 * jax.random.normal(ks[7], (dim,), jnp.float32)
    return (lnm_w, lnm_b, lnl_w, lnl_b, wq, bq, wkv, bkv, wout, bout)


if __name__ == "__main__":
    # Small shapes consistent with the module (dim_head=128 is the module
    # default, which also keeps per-head tiles lane-aligned on TPU).
    batch, m_seq, n_lat, dim = 2, 16, 8, 32
    heads, dim_head = 2, 128

    key = jax.random.PRNGKey(0)
    kx, kl, kp = jax.random.split(key, 3)
    x = jax.random.normal(kx, (batch, m_seq, dim), jnp.float32)
    latents = jax.random.normal(kl, (batch, n_lat, dim), jnp.float32)
    params = make_params(kp, dim, heads, dim_head)

    ref = perceiver_attention_ref(x, latents, params, heads=heads, dim_head=dim_head)

    # f32 MXU path (tolerance covers the approx-reciprocal softmax normalization).
    out_f32 = perceiver_attention(x, latents, params, heads=heads, dim_head=dim_head,
                                  compute_dtype=jnp.float32)
    out_f32 = jax.block_until_ready(out_f32)
    assert out_f32.shape == (batch, n_lat, dim)
    assert jnp.allclose(out_f32, ref, atol=5e-3, rtol=5e-3), "f32 kernel mismatch vs reference"

    # bf16 MXU path (recommended on v6e/v7x): bf16 operands, f32 accumulation.
    out_bf16 = perceiver_attention(x, latents, params, heads=heads, dim_head=dim_head,
                                   compute_dtype=jnp.bfloat16)
    out_bf16 = jax.block_until_ready(out_bf16)
    assert jnp.allclose(out_bf16, ref, atol=5e-2, rtol=5e-2), "bf16 kernel mismatch vs reference"

    print("KERNEL_OK")
</pallas_src>

<mosaic_0001>
module attributes {stable_mosaic.version = 11 : i64} {
  func.func @_perceiver_attention_kernel(%arg0: i32, %arg1: i32, %arg2: memref<2x16x32xf32, #tpu.memory_space<vmem>>, %arg3: memref<2x8x32xf32, #tpu.memory_space<vmem>>, %arg4: memref<1x32xf32, #tpu.memory_space<vmem>>, %arg5: memref<1x32xf32, #tpu.memory_space<vmem>>, %arg6: memref<1x32xf32, #tpu.memory_space<vmem>>, %arg7: memref<1x32xf32, #tpu.memory_space<vmem>>, %arg8: memref<1x32x128xf32, #tpu.memory_space<vmem>>, %arg9: memref<1x1x128xf32, #tpu.memory_space<vmem>>, %arg10: memref<1x32x128xf32, #tpu.memory_space<vmem>>, %arg11: memref<1x1x128xf32, #tpu.memory_space<vmem>>, %arg12: memref<1x32x128xf32, #tpu.memory_space<vmem>>, %arg13: memref<1x1x128xf32, #tpu.memory_space<vmem>>, %arg14: memref<1x128x32xf32, #tpu.memory_space<vmem>>, %arg15: memref<1x32xf32, #tpu.memory_space<vmem>>, %arg16: memref<2x8x32xf32, #tpu.memory_space<vmem>>, %arg17: memref<2x16x32xf32, #tpu.memory_space<vmem>>, %arg18: memref<2x8x32xf32, #tpu.memory_space<vmem>>, %arg19: memref<2x8x32xf32, #tpu.memory_space<vmem>>) attributes {dimension_semantics = [#tpu.dimension_semantics<parallel>, #tpu.dimension_semantics<arbitrary>], iteration_bounds = array<i64: 1, 2>, scalar_prefetch = 0 : i64, scratch_operands = 3 : i64, tpu.core_type = #tpu.core_type<tc>, window_params = [{transform_indices = @transform_0, window_bounds = array<i64: 2, 16, 32>}, {transform_indices = @transform_1, window_bounds = array<i64: 2, 8, 32>}, {pipeline_mode = #tpu.pipeline_mode<synchronous>, transform_indices = @transform_2, window_bounds = array<i64: 1, 32>}, {pipeline_mode = #tpu.pipeline_mode<synchronous>, transform_indices = @transform_3, window_bounds = array<i64: 1, 32>}, {pipeline_mode = #tpu.pipeline_mode<synchronous>, transform_indices = @transform_4, window_bounds = array<i64: 1, 32>}, {pipeline_mode = #tpu.pipeline_mode<synchronous>, transform_indices = @transform_5, window_bounds = array<i64: 1, 32>}, {transform_indices = @transform_6, window_bounds = array<i64: 1, 32, 128>}, {transform_indices = @transform_7, window_bounds = array<i64: 1, 1, 128>}, {transform_indices = @transform_8, window_bounds = array<i64: 1, 32, 128>}, {transform_indices = @transform_9, window_bounds = array<i64: 1, 1, 128>}, {transform_indices = @transform_10, window_bounds = array<i64: 1, 32, 128>}, {transform_indices = @transform_11, window_bounds = array<i64: 1, 1, 128>}, {transform_indices = @transform_12, window_bounds = array<i64: 1, 128, 32>}, {pipeline_mode = #tpu.pipeline_mode<synchronous>, transform_indices = @transform_13, window_bounds = array<i64: 1, 32>}, {transform_indices = @transform_14, window_bounds = array<i64: 2, 8, 32>}]} {
    %c0_i32 = arith.constant 0 : i32
    %0 = arith.cmpi eq, %arg1, %c0_i32 : i32
    %1 = arith.extui %0 : i1 to i32
    %c0_i32_0 = arith.constant 0 : i32
    %2 = arith.cmpi ne, %1, %c0_i32_0 : i32
    scf.if %2 {
      %c0_54 = arith.constant 0 : index
      %c0_55 = arith.constant 0 : index
      %c0_56 = arith.constant 0 : index
      %80 = vector.load %arg2[%c0_54, %c0_55, %c0_56] : memref<2x16x32xf32, #tpu.memory_space<vmem>>, vector<2x16x32xf32>
      %c0_57 = arith.constant 0 : index
      %c0_58 = arith.constant 0 : index
      %81 = vector.load %arg4[%c0_57, %c0_58] : memref<1x32xf32, #tpu.memory_space<vmem>>, vector<1x32xf32>
      %c0_59 = arith.constant 0 : index
      %c0_60 = arith.constant 0 : index
      %82 = vector.load %arg5[%c0_59, %c0_60] : memref<1x32xf32, #tpu.memory_space<vmem>>, vector<1x32xf32>
      %cst_61 = arith.constant dense<0.000000e+00> : vector<2x16xf32>
      %83 = vector.multi_reduction <add>, %80, %cst_61 [2] : vector<2x16x32xf32> to vector<2x16xf32>
      %84 = vector.shape_cast %83 : vector<2x16xf32> to vector<2x16x1xf32>
      %cst_62 = arith.constant 3.200000e+01 : f32
      %85 = vector.broadcast %cst_62 : f32 to vector<2x16x1xf32>
      %86 = arith.divf %84, %85 : vector<2x16x1xf32>
      %87 = vector.broadcast %86 : vector<2x16x1xf32> to vector<2x16x32xf32>
      %88 = arith.subf %80, %87 : vector<2x16x32xf32>
      %89 = arith.mulf %88, %88 : vector<2x16x32xf32>
      %cst_63 = arith.constant dense<0.000000e+00> : vector<2x16xf32>
      %90 = vector.multi_reduction <add>, %89, %cst_63 [2] : vector<2x16x32xf32> to vector<2x16xf32>
      %91 = vector.shape_cast %90 : vector<2x16xf32> to vector<2x16x1xf32>
      %cst_64 = arith.constant 3.200000e+01 : f32
      %92 = vector.broadcast %cst_64 : f32 to vector<2x16x1xf32>
      %93 = arith.divf %91, %92 : vector<2x16x1xf32>
      %94 = vector.broadcast %86 : vector<2x16x1xf32> to vector<2x16x32xf32>
      %95 = arith.subf %80, %94 : vector<2x16x32xf32>
      %cst_65 = arith.constant 9.99999974E-6 : f32
      %96 = vector.broadcast %cst_65 : f32 to vector<2x16x1xf32>
      %97 = arith.addf %93, %96 : vector<2x16x1xf32>
      %98 = math.rsqrt %97 : vector<2x16x1xf32>
      %99 = vector.broadcast %98 : vector<2x16x1xf32> to vector<2x16x32xf32>
      %100 = arith.mulf %95, %99 : vector<2x16x32xf32>
      %101 = vector.shape_cast %81 : vector<1x32xf32> to vector<1x1x32xf32>
      %102 = vector.broadcast %101 : vector<1x1x32xf32> to vector<2x16x32xf32>
      %103 = arith.mulf %100, %102 : vector<2x16x32xf32>
      %104 = vector.shape_cast %82 : vector<1x32xf32> to vector<1x1x32xf32>
      %105 = vector.broadcast %104 : vector<1x1x32xf32> to vector<2x16x32xf32>
      %106 = arith.addf %103, %105 : vector<2x16x32xf32>
      %c0_66 = arith.constant 0 : index
      %c0_67 = arith.constant 0 : index
      %c0_68 = arith.constant 0 : index
      %107 = vector.load %arg17[%c0_66, %c0_67, %c0_68] : memref<2x16x32xf32, #tpu.memory_space<vmem>>, vector<2x16x32xf32>
      tpu.vector_store %arg17[%c0_66, %c0_67, %c0_68], %106 {strides = array<i32>} : memref<2x16x32xf32, #tpu.memory_space<vmem>>, vector<2x16x32xf32>,
      %c0_69 = arith.constant 0 : index
      %c0_70 = arith.constant 0 : index
      %c0_71 = arith.constant 0 : index
      %108 = vector.load %arg3[%c0_69, %c0_70, %c0_71] : memref<2x8x32xf32, #tpu.memory_space<vmem>>, vector<2x8x32xf32>
      %c0_72 = arith.constant 0 : index
      %c0_73 = arith.constant 0 : index
      %109 = vector.load %arg6[%c0_72, %c0_73] : memref<1x32xf32, #tpu.memory_space<vmem>>, vector<1x32xf32>
      %c0_74 = arith.constant 0 : index
      %c0_75 = arith.constant 0 : index
      %110 = vector.load %arg7[%c0_74, %c0_75] : memref<1x32xf32, #tpu.memory_space<vmem>>, vector<1x32xf32>
      %cst_76 = arith.constant dense<0.000000e+00> : vector<2x8xf32>
      %111 = vector.multi_reduction <add>, %108, %cst_76 [2] : vector<2x8x32xf32> to vector<2x8xf32>
      %112 = vector.shape_cast %111 : vector<2x8xf32> to vector<2x8x1xf32>
      %cst_77 = arith.constant 3.200000e+01 : f32
      %113 = vector.broadcast %cst_77 : f32 to vector<2x8x1xf32>
      %114 = arith.divf %112, %113 : vector<2x8x1xf32>
      %115 = vector.broadcast %114 : vector<2x8x1xf32> to vector<2x8x32xf32>
      %116 = arith.subf %108, %115 : vector<2x8x32xf32>
      %117 = arith.mulf %116, %116 : vector<2x8x32xf32>
      %cst_78 = arith.constant dense<0.000000e+00> : vector<2x8xf32>
      %118 = vector.multi_reduction <add>, %117, %cst_78 [2] : vector<2x8x32xf32> to vector<2x8xf32>
      %119 = vector.shape_cast %118 : vector<2x8xf32> to vector<2x8x1xf32>
      %cst_79 = arith.constant 3.200000e+01 : f32
      %120 = vector.broadcast %cst_79 : f32 to vector<2x8x1xf32>
      %121 = arith.divf %119, %120 : vector<2x8x1xf32>
      %122 = vector.broadcast %114 : vector<2x8x1xf32> to vector<2x8x32xf32>
      %123 = arith.subf %108, %122 : vector<2x8x32xf32>
      %cst_80 = arith.constant 9.99999974E-6 : f32
      %124 = vector.broadcast %cst_80 : f32 to vector<2x8x1xf32>
      %125 = arith.addf %121, %124 : vector<2x8x1xf32>
      %126 = math.rsqrt %125 : vector<2x8x1xf32>
      %127 = vector.broadcast %126 : vector<2x8x1xf32> to vector<2x8x32xf32>
      %128 = arith.mulf %123, %127 : vector<2x8x32xf32>
      %129 = vector.shape_cast %109 : vector<1x32xf32> to vector<1x1x32xf32>
      %130 = vector.broadcast %129 : vector<1x1x32xf32> to vector<2x8x32xf32>
      %131 = arith.mulf %128, %130 : vector<2x8x32xf32>
      %132 = vector.shape_cast %110 : vector<1x32xf32> to vector<1x1x32xf32>
      %133 = vector.broadcast %132 : vector<1x1x32xf32> to vector<2x8x32xf32>
      %134 = arith.addf %131, %133 : vector<2x8x32xf32>
      %c0_81 = arith.constant 0 : index
      %c0_82 = arith.constant 0 : index
      %c0_83 = arith.constant 0 : index
      %135 = vector.load %arg18[%c0_81, %c0_82, %c0_83] : memref<2x8x32xf32, #tpu.memory_space<vmem>>, vector<2x8x32xf32>
      tpu.vector_store %arg18[%c0_81, %c0_82, %c0_83], %134 {strides = array<i32>} : memref<2x8x32xf32, #tpu.memory_space<vmem>>, vector<2x8x32xf32>,
      %cst_84 = arith.constant 0.000000e+00 : f32
      %136 = vector.broadcast %cst_84 : f32 to vector<2x8x32xf32>
      %c0_85 = arith.constant 0 : index
      %c0_86 = arith.constant 0 : index
      %c0_87 = arith.constant 0 : index
      %137 = vector.load %arg19[%c0_85, %c0_86, %c0_87] : memref<2x8x32xf32, #tpu.memory_space<vmem>>, vector<2x8x32xf32>
      tpu.vector_store %arg19[%c0_85, %c0_86, %c0_87], %136 {strides = array<i32>} : memref<2x8x32xf32, #tpu.memory_space<vmem>>, vector<2x8x32xf32>,
    } else {
    }
    %c0 = arith.constant 0 : index
    %c0_1 = arith.constant 0 : index
    %c0_2 = arith.constant 0 : index
    %3 = vector.load %arg17[%c0, %c0_1, %c0_2] : memref<2x16x32xf32, #tpu.memory_space<vmem>>, vector<2x16x32xf32>
    %4 = vector.shape_cast %3 : vector<2x16x32xf32> to vector<32x32xf32>
    %c0_3 = arith.constant 0 : index
    %c0_4 = arith.constant 0 : index
    %c0_5 = arith.constant 0 : index
    %5 = vector.load %arg18[%c0_3, %c0_4, %c0_5] : memref<2x8x32xf32, #tpu.memory_space<vmem>>, vector<2x8x32xf32>
    %6 = vector.shape_cast %5 : vector<2x8x32xf32> to vector<16x32xf32>
    %c0_6 = arith.constant 0 : index
    %c0_7 = arith.constant 0 : index
    %c0_8 = arith.constant 0 : index
    %7 = vector.load %arg8[%c0_6, %c0_7, %c0_8] : memref<1x32x128xf32, #tpu.memory_space<vmem>>, vector<1x32x128xf32>
    %8 = vector.shape_cast %7 : vector<1x32x128xf32> to vector<32x128xf32>
    %c0_9 = arith.constant 0 : index
    %c0_10 = arith.constant 0 : index
    %c0_11 = arith.constant 0 : index
    %9 = vector.load %arg10[%c0_9, %c0_10, %c0_11] : memref<1x32x128xf32, #tpu.memory_space<vmem>>, vector<1x32x128xf32>
    %10 = vector.shape_cast %9 : vector<1x32x128xf32> to vector<32x128xf32>
    %c0_12 = arith.constant 0 : index
    %c0_13 = arith.constant 0 : index
    %c0_14 = arith.constant 0 : index
    %11 = vector.load %arg12[%c0_12, %c0_13, %c0_14] : memref<1x32x128xf32, #tpu.memory_space<vmem>>, vector<1x32x128xf32>
    %12 = vector.shape_cast %11 : vector<1x32x128xf32> to vector<32x128xf32>
    %cst = arith.constant dense<0.000000e+00> : vector<16x128xf32>
    %13 = tpu.matmul %6, %8, %cst {dimension_numbers = #tpu.dot_dimension_numbers<[1], [0], [0], [1], [0, 0, 1, 1], [], []>} : vector<16x32xf32>, vector<32x128xf32>, vector<16x128xf32> -> vector<16x128xf32>
    %c0_15 = arith.constant 0 : index
    %c0_16 = arith.constant 0 : index
    %c0_17 = arith.constant 0 : index
    %14 = vector.load %arg9[%c0_15, %c0_16, %c0_17] : memref<1x1x128xf32, #tpu.memory_space<vmem>>, vector<1x1x128xf32>
    %15 = vector.shape_cast %14 : vector<1x1x128xf32> to vector<1x128xf32>
    %16 = vector.broadcast %15 : vector<1x128xf32> to vector<16x128xf32>
    %17 = arith.addf %13, %16 : vector<16x128xf32>
    %cst_18 = arith.constant 0.0883883461 : f32
    %18 = vector.broadcast %cst_18 : f32 to vector<16x128xf32>
    %19 = arith.mulf %17, %18 : vector<16x128xf32>
    %cst_19 = arith.constant dense<0.000000e+00> : vector<32x128xf32>
    %20 = tpu.matmul %4, %10, %cst_19 {dimension_numbers = #tpu.dot_dimension_numbers<[1], [0], [0], [1], [0, 0, 1, 1], [], []>} : vector<32x32xf32>, vector<32x128xf32>, vector<32x128xf32> -> vector<32x128xf32>
    %c0_20 = arith.constant 0 : index
    %c0_21 = arith.constant 0 : index
    %c0_22 = arith.constant 0 : index
    %21 = vector.load %arg11[%c0_20, %c0_21, %c0_22] : memref<1x1x128xf32, #tpu.memory_space<vmem>>, vector<1x1x128xf32>
    %22 = vector.shape_cast %21 : vector<1x1x128xf32> to vector<1x128xf32>
    %23 = vector.broadcast %22 : vector<1x128xf32> to vector<32x128xf32>
    %24 = arith.addf %20, %23 : vector<32x128xf32>
    %cst_23 = arith.constant dense<0.000000e+00> : vector<16x128xf32>
    %25 = tpu.matmul %6, %10, %cst_23 {dimension_numbers = #tpu.dot_dimension_numbers<[1], [0], [0], [1], [0, 0, 1, 1], [], []>} : vector<16x32xf32>, vector<32x128xf32>, vector<16x128xf32> -> vector<16x128xf32>
    %c0_24 = arith.constant 0 : index
    %c0_25 = arith.constant 0 : index
    %c0_26 = arith.constant 0 : index
    %26 = vector.load %arg11[%c0_24, %c0_25, %c0_26] : memref<1x1x128xf32, #tpu.memory_space<vmem>>, vector<1x1x128xf32>
    %27 = vector.shape_cast %26 : vector<1x1x128xf32> to vector<1x128xf32>
    %28 = vector.broadcast %27 : vector<1x128xf32> to vector<16x128xf32>
    %29 = arith.addf %25, %28 : vector<16x128xf32>
    %cst_27 = arith.constant dense<0.000000e+00> : vector<32x128xf32>
    %30 = tpu.matmul %4, %12, %cst_27 {dimension_numbers = #tpu.dot_dimension_numbers<[1], [0], [0], [1], [0, 0, 1, 1], [], []>} : vector<32x32xf32>, vector<32x128xf32>, vector<32x128xf32> -> vector<32x128xf32>
    %c0_28 = arith.constant 0 : index
    %c0_29 = arith.constant 0 : index
    %c0_30 = arith.constant 0 : index
    %31 = vector.load %arg13[%c0_28, %c0_29, %c0_30] : memref<1x1x128xf32, #tpu.memory_space<vmem>>, vector<1x1x128xf32>
    %32 = vector.shape_cast %31 : vector<1x1x128xf32> to vector<1x128xf32>
    %33 = vector.broadcast %32 : vector<1x128xf32> to vector<32x128xf32>
    %34 = arith.addf %30, %33 : vector<32x128xf32>
    %cst_31 = arith.constant dense<0.000000e+00> : vector<16x128xf32>
    %35 = tpu.matmul %6, %12, %cst_31 {dimension_numbers = #tpu.dot_dimension_numbers<[1], [0], [0], [1], [0, 0, 1, 1], [], []>} : vector<16x32xf32>, vector<32x128xf32>, vector<16x128xf32> -> vector<16x128xf32>
    %c0_32 = arith.constant 0 : index
    %c0_33 = arith.constant 0 : index
    %c0_34 = arith.constant 0 : index
    %36 = vector.load %arg13[%c0_32, %c0_33, %c0_34] : memref<1x1x128xf32, #tpu.memory_space<vmem>>, vector<1x1x128xf32>
    %37 = vector.shape_cast %36 : vector<1x1x128xf32> to vector<1x128xf32>
    %38 = vector.broadcast %37 : vector<1x128xf32> to vector<16x128xf32>
    %39 = arith.addf %35, %38 : vector<16x128xf32>
    %40 = vector.shape_cast %19 : vector<16x128xf32> to vector<2x8x128xf32>
    %41 = vector.shape_cast %24 : vector<32x128xf32> to vector<2x16x128xf32>
    %42 = vector.shape_cast %29 : vector<16x128xf32> to vector<2x8x128xf32>
    %43 = vector.shape_cast %34 : vector<32x128xf32> to vector<2x16x128xf32>
    %44 = vector.shape_cast %39 : vector<16x128xf32> to vector<2x8x128xf32>
    "tpu.trace_start"() <{level = 10 : i32, message = "bid,bjd->bij"}> : () -> ()
    %cst_35 = arith.constant dense<0.000000e+00> : vector<2x8x16xf32>
    %45 = tpu.matmul %40, %41, %cst_35 {dimension_numbers = #tpu.dot_dimension_numbers<[2], [2], [1], [1], [0, 0, 0, 1, 1, 1], [0], [0]>} : vector<2x8x128xf32>, vector<2x16x128xf32>, vector<2x8x16xf32> -> vector<2x8x16xf32>
    %cst_36 = arith.constant dense<0.000000e+00> : vector<2x8x8xf32>
    %46 = tpu.matmul %40, %42, %cst_36 {dimension_numbers = #tpu.dot_dimension_numbers<[2], [2], [1], [1], [0, 0, 0, 1, 1, 1], [0], [0]>} : vector<2x8x128xf32>, vector<2x8x128xf32>, vector<2x8x8xf32> -> vector<2x8x8xf32>
    "tpu.trace_stop"() : () -> ()
    %cst_37 = arith.constant dense<0xFF800000> : vector<2x8xf32>
    %47 = vector.multi_reduction <maximumf>, %45, %cst_37 [2] : vector<2x8x16xf32> to vector<2x8xf32>
    %48 = vector.shape_cast %47 : vector<2x8xf32> to vector<2x8x1xf32>
    %cst_38 = arith.constant dense<0xFF800000> : vector<2x8xf32>
    %49 = vector.multi_reduction <maximumf>, %46, %cst_38 [2] : vector<2x8x8xf32> to vector<2x8xf32>
    %50 = vector.shape_cast %49 : vector<2x8xf32> to vector<2x8x1xf32>
    %51 = arith.maximumf %48, %50 : vector<2x8x1xf32>
    %52 = vector.broadcast %51 : vector<2x8x1xf32> to vector<2x8x16xf32>
    %53 = arith.subf %45, %52 : vector<2x8x16xf32>
    %54 = math.exp %53 : vector<2x8x16xf32>
    %55 = vector.broadcast %51 : vector<2x8x1xf32> to vector<2x8x8xf32>
    %56 = arith.subf %46, %55 : vector<2x8x8xf32>
    %57 = math.exp %56 : vector<2x8x8xf32>
    %cst_39 = arith.constant dense<0.000000e+00> : vector<2x8xf32>
    %58 = vector.multi_reduction <add>, %54, %cst_39 [2] : vector<2x8x16xf32> to vector<2x8xf32>
    %59 = vector.shape_cast %58 : vector<2x8xf32> to vector<2x8x1xf32>
    %cst_40 = arith.constant dense<0.000000e+00> : vector<2x8xf32>
    %60 = vector.multi_reduction <add>, %57, %cst_40 [2] : vector<2x8x8xf32> to vector<2x8xf32>
    %61 = vector.shape_cast %60 : vector<2x8xf32> to vector<2x8x1xf32>
    %62 = arith.addf %59, %61 : vector<2x8x1xf32>
    %63 = tpu.reciprocal %62 {approx = true} : vector<2x8x1xf32> -> vector<2x8x1xf32>
    "tpu.trace_start"() <{level = 10 : i32, message = "bij,bjd->bid"}> : () -> ()
    %cst_41 = arith.constant dense<0.000000e+00> : vector<2x8x128xf32>
    %64 = tpu.matmul %54, %43, %cst_41 {dimension_numbers = #tpu.dot_dimension_numbers<[2], [1], [1], [2], [0, 0, 0, 1, 1, 2], [0], [0]>} : vector<2x8x16xf32>, vector<2x16x128xf32>, vector<2x8x128xf32> -> vector<2x8x128xf32>
    %cst_42 = arith.constant dense<0.000000e+00> : vector<2x8x128xf32>
    %65 = tpu.matmul %57, %44, %cst_42 {dimension_numbers = #tpu.dot_dimension_numbers<[2], [1], [1], [2], [0, 0, 0, 1, 1, 2], [0], [0]>} : vector<2x8x8xf32>, vector<2x8x128xf32>, vector<2x8x128xf32> -> vector<2x8x128xf32>
    "tpu.trace_stop"() : () -> ()
    %66 = arith.addf %64, %65 : vector<2x8x128xf32>
    %67 = vector.broadcast %63 : vector<2x8x1xf32> to vector<2x8x128xf32>
    %68 = arith.mulf %66, %67 : vector<2x8x128xf32>
    %69 = vector.shape_cast %68 : vector<2x8x128xf32> to vector<16x128xf32>
    %c0_43 = arith.constant 0 : index
    %c0_44 = arith.constant 0 : index
    %c0_45 = arith.constant 0 : index
    %70 = vector.load %arg19[%c0_43, %c0_44, %c0_45] : memref<2x8x32xf32, #tpu.memory_space<vmem>>, vector<2x8x32xf32>
    %c0_46 = arith.constant 0 : index
    %c0_47 = arith.constant 0 : index
    %c0_48 = arith.constant 0 : index
    %71 = vector.load %arg14[%c0_46, %c0_47, %c0_48] : memref<1x128x32xf32, #tpu.memory_space<vmem>>, vector<1x128x32xf32>
    %72 = vector.shape_cast %71 : vector<1x128x32xf32> to vector<128x32xf32>
    %cst_49 = arith.constant dense<0.000000e+00> : vector<16x32xf32>
    %73 = tpu.matmul %69, %72, %cst_49 {dimension_numbers = #tpu.dot_dimension_numbers<[1], [0], [0], [1], [0, 0, 1, 1], [], []>} : vector<16x128xf32>, vector<128x32xf32>, vector<16x32xf32> -> vector<16x32xf32>
    %74 = vector.shape_cast %73 : vector<16x32xf32> to vector<2x8x32xf32>
    %75 = arith.addf %70, %74 : vector<2x8x32xf32>
    %c0_50 = arith.constant 0 : index
    %c0_51 = arith.constant 0 : index
    %c0_52 = arith.constant 0 : index
    %76 = vector.load %arg19[%c0_50, %c0_51, %c0_52] : memref<2x8x32xf32, #tpu.memory_space<vmem>>, vector<2x8x32xf32>
    tpu.vector_store %arg19[%c0_50, %c0_51, %c0_52], %75 {strides = array<i32>} : memref<2x8x32xf32, #tpu.memory_space<vmem>>, vector<2x8x32xf32>,
    %c1_i32 = arith.constant 1 : i32
    %77 = arith.cmpi eq, %arg1, %c1_i32 : i32
    %78 = arith.extui %77 : i1 to i32
    %c0_i32_53 = arith.constant 0 : i32
    %79 = arith.cmpi ne, %78, %c0_i32_53 : i32
    scf.if %79 {
      %c0_54 = arith.constant 0 : index
      %c0_55 = arith.constant 0 : index
      %c0_56 = arith.constant 0 : index
      %80 = vector.load %arg19[%c0_54, %c0_55, %c0_56] : memref<2x8x32xf32, #tpu.memory_space<vmem>>, vector<2x8x32xf32>
      %c0_57 = arith.constant 0 : index
      %c0_58 = arith.constant 0 : index
      %81 = vector.load %arg15[%c0_57, %c0_58] : memref<1x32xf32, #tpu.memory_space<vmem>>, vector<1x32xf32>
      %82 = vector.shape_cast %81 : vector<1x32xf32> to vector<1x1x32xf32>
      %83 = vector.broadcast %82 : vector<1x1x32xf32> to vector<2x8x32xf32>
      %84 = arith.addf %80, %83 : vector<2x8x32xf32>
      %c0_59 = arith.constant 0 : index
      %c0_60 = arith.constant 0 : index
      %c0_61 = arith.constant 0 : index
      %85 = vector.load %arg16[%c0_59, %c0_60, %c0_61] : memref<2x8x32xf32, #tpu.memory_space<vmem>>, vector<2x8x32xf32>
      tpu.vector_store %arg16[%c0_59, %c0_60, %c0_61], %84 {strides = array<i32>} : memref<2x8x32xf32, #tpu.memory_space<vmem>>, vector<2x8x32xf32>,
    } else {
    }
    return
  }
  func.func @transform_0(%arg0: i32, %arg1: i32) -> (i32, i32, i32) {
    %c0_i32 = arith.constant 0 : i32
    %c0_i32_0 = arith.constant 0 : i32
    %c0_i32_1 = arith.constant 0 : i32
    return %arg0, %c0_i32, %c0_i32_0 : i32, i32, i32
  }
  func.func @transform_1(%arg0: i32, %arg1: i32) -> (i32, i32, i32) {
    %c0_i32 = arith.constant 0 : i32
    %c0_i32_0 = arith.constant 0 : i32
    %c0_i32_1 = arith.constant 0 : i32
    return %arg0, %c0_i32, %c0_i32_0 : i32, i32, i32
  }
  func.func @transform_2(%arg0: i32, %arg1: i32) -> (i32, i32) {
    %c0_i32 = arith.constant 0 : i32
    %c0_i32_0 = arith.constant 0 : i32
    %c0_i32_1 = arith.constant 0 : i32
    return %c0_i32, %c0_i32_0 : i32, i32
  }
  func.func @transform_3(%arg0: i32, %arg1: i32) -> (i32, i32) {
    %c0_i32 = arith.constant 0 : i32
    %c0_i32_0 = arith.constant 0 : i32
    %c0_i32_1 = arith.constant 0 : i32
    return %c0_i32, %c0_i32_0 : i32, i32
  }
  func.func @transform_4(%arg0: i32, %arg1: i32) -> (i32, i32) {
    %c0_i32 = arith.constant 0 : i32
    %c0_i32_0 = arith.constant 0 : i32
    %c0_i32_1 = arith.constant 0 : i32
    return %c0_i32, %c0_i32_0 : i32, i32
  }
  func.func @transform_5(%arg0: i32, %arg1: i32) -> (i32, i32) {
    %c0_i32 = arith.constant 0 : i32
    %c0_i32_0 = arith.constant 0 : i32
    %c0_i32_1 = arith.constant 0 : i32
    return %c0_i32, %c0_i32_0 : i32, i32
  }
  func.func @transform_6(%arg0: i32, %arg1: i32) -> (i32, i32, i32) {
    %c0_i32 = arith.constant 0 : i32
    %c0_i32_0 = arith.constant 0 : i32
    %c0_i32_1 = arith.constant 0 : i32
    return %arg1, %c0_i32, %c0_i32_0 : i32, i32, i32
  }
  func.func @transform_7(%arg0: i32, %arg1: i32) -> (i32, i32, i32) {
    %c0_i32 = arith.constant 0 : i32
    %c0_i32_0 = arith.constant 0 : i32
    %c0_i32_1 = arith.constant 0 : i32
    return %arg1, %c0_i32, %c0_i32_0 : i32, i32, i32
  }
  func.func @transform_8(%arg0: i32, %arg1: i32) -> (i32, i32, i32) {
    %c0_i32 = arith.constant 0 : i32
    %c0_i32_0 = arith.constant 0 : i32
    %c0_i32_1 = arith.constant 0 : i32
    return %arg1, %c0_i32, %c0_i32_0 : i32, i32, i32
  }
  func.func @transform_9(%arg0: i32, %arg1: i32) -> (i32, i32, i32) {
    %c0_i32 = arith.constant 0 : i32
    %c0_i32_0 = arith.constant 0 : i32
    %c0_i32_1 = arith.constant 0 : i32
    return %arg1, %c0_i32, %c0_i32_0 : i32, i32, i32
  }
  func.func @transform_10(%arg0: i32, %arg1: i32) -> (i32, i32, i32) {
    %c0_i32 = arith.constant 0 : i32
    %c0_i32_0 = arith.constant 0 : i32
    %c0_i32_1 = arith.constant 0 : i32
    return %arg1, %c0_i32, %c0_i32_0 : i32, i32, i32
  }
  func.func @transform_11(%arg0: i32, %arg1: i32) -> (i32, i32, i32) {
    %c0_i32 = arith.constant 0 : i32
    %c0_i32_0 = arith.constant 0 : i32
    %c0_i32_1 = arith.constant 0 : i32
    return %arg1, %c0_i32, %c0_i32_0 : i32, i32, i32
  }
  func.func @transform_12(%arg0: i32, %arg1: i32) -> (i32, i32, i32) {
    %c0_i32 = arith.constant 0 : i32
    %c0_i32_0 = arith.constant 0 : i32
    %c0_i32_1 = arith.constant 0 : i32
    return %arg1, %c0_i32, %c0_i32_0 : i32, i32, i32
  }
  func.func @transform_13(%arg0: i32, %arg1: i32) -> (i32, i32) {
    %c0_i32 = arith.constant 0 : i32
    %c0_i32_0 = arith.constant 0 : i32
    %c0_i32_1 = arith.constant 0 : i32
    return %c0_i32, %c0_i32_0 : i32, i32
  }
  func.func @transform_14(%arg0: i32, %arg1: i32) -> (i32, i32, i32) {
    %c0_i32 = arith.constant 0 : i32
    %c0_i32_0 = arith.constant 0 : i32
    %c0_i32_1 = arith.constant 0 : i32
    return %arg0, %c0_i32, %c0_i32_0 : i32, i32, i32
  }
}

</mosaic_0001>

<llo_original>
// kernel: tpu_custom_call.1
$region0: #{tpu_custom_call.1}
  #allocation0 [shape = 'u32[]', space=smem, size = 0x4, offset = 0x4, fixed_abs, tag = 'smem constant byte address 0x4 - core index']
  #allocation1 [shape = 'u32[144,128]{1,0:T(1,128)}', space=vmem, size = 0x12000, scoped, tag = 'internal scratch']
  #allocation2 [shape = 'f32[2,16,32]{2,1,0:T(8,128)}', space=vmem, size = 0x4000, scoped, tag = 'scratch operand']
  #allocation3 [shape = 'f32[2,8,32]{2,1,0:T(8,128)}', space=vmem, size = 0x2000, scoped, tag = 'scratch operand']
  #allocation4 [shape = 'f32[2,8,32]{2,1,0:T(8,128)}', space=vmem, size = 0x2000, scoped, tag = 'scratch operand']
  %s0 = inlined_call_operand.vmem [shape: f32[2,16,32], index: 0, kind: input, shape index: {}]
  %s1 = inlined_call_operand.vmem [shape: f32[2,8,32], index: 1, kind: input, shape index: {}]
  %s2 = inlined_call_operand.vmem [shape: f32[1,32], index: 2, kind: input, shape index: {}]
  %s3 = inlined_call_operand.vmem [shape: f32[1,32], index: 3, kind: input, shape index: {}]
  %s4 = inlined_call_operand.vmem [shape: f32[1,32], index: 4, kind: input, shape index: {}]
  %s5 = inlined_call_operand.vmem [shape: f32[1,32], index: 5, kind: input, shape index: {}]
  %s6 = inlined_call_operand.vmem [shape: f32[2,32,128], index: 6, kind: input, shape index: {}]
  %s7 = inlined_call_operand.vmem [shape: f32[2,1,128], index: 7, kind: input, shape index: {}]
  %s8 = inlined_call_operand.vmem [shape: f32[2,32,128], index: 8, kind: input, shape index: {}]
  %s9 = inlined_call_operand.vmem [shape: f32[2,1,128], index: 9, kind: input, shape index: {}]
  %s10 = inlined_call_operand.vmem [shape: f32[2,32,128], index: 10, kind: input, shape index: {}]
  %s11 = inlined_call_operand.vmem [shape: f32[2,1,128], index: 11, kind: input, shape index: {}]
  %s12 = inlined_call_operand.vmem [shape: f32[2,128,32], index: 12, kind: input, shape index: {}]
  %s13 = inlined_call_operand.vmem [shape: f32[1,32], index: 13, kind: input, shape index: {}]
  %s14 = inlined_call_operand.hbm [shape: f32[2,8,32], index: 14, kind: output, shape index: {}]
  %s15 = sld [smem:[#allocation0]]
  $region97: #{tpu_custom_call.1} parent=0
    _
  %s17 = ssub.s32 1, %s15
  %s18 = scalar_select 0, %s17, %s15
  $region1: #{tpu_custom_call.1} parent=0
    #allocation5 [shape = 'u8[8192]{0}', space=vmem, size = 0x2000, scoped, tag = 'output window, operand 0, single buffered']
    #allocation6 [shape = 's32[2]{0}', space=sflag, size = 0x8, scoped, tag = 'scoped memory for tpu_custom_call.1']
    %19 = vsyncpa [#allocation6], 0
    loop: start=0, step=1, limit=4
    $region2: #{tpu_custom_call.1} parent=1 // loop_pre_header
      _
    $region3: #{tpu_custom_call.1} parent=1 // loop_header
      %s21 = sphi 0, %s25
      %p22 = scmp.ge.s32.totalorder %s21, 4
      %s28 = sphi 0, %s40
      %s29 = sphi 0, %s36
      %s30 = sphi 0, %s28
      %s31 = sphi 0, %s29
      %s32 = sphi 0, %s30
      %s33 = sphi 0, %s31
      %s43 = sphi 0, %s45
      %s46 = sphi 0, %s43
      %s47 = sphi 0, %s46
      %s63 = sphi 0, %s47
      %s69 = sphi 0, %s71
      %s72 = sphi 0, %s69
      %s73 = sphi 0, %s72
      %s89 = sphi 0, %s73
      %s93 = sphi 0, %s93
      %s95 = sphi 0, %s93
      %s96 = sphi 0, %s95
      %s110 = sphi 0, %s96
      %s114 = sphi 0, %s114
      %s116 = sphi 0, %s114
      %s117 = sphi 0, %s116
      %s131 = sphi 0, %s117
      %s135 = sphi 0, %s135
      %s137 = sphi 0, %s135
      %s138 = sphi 0, %s137
      %s152 = sphi 0, %s138
      %s156 = sphi 0, %s156
      %s158 = sphi 0, %s156
      %s159 = sphi 0, %s158
      %s173 = sphi 0, %s159
      %s179 = sphi 0, %s181
      %s182 = sphi 0, %s179
      %s183 = sphi 0, %s182
      %s199 = sphi 0, %s183
      %s205 = sphi 0, %s207
      %s208 = sphi 0, %s205
      %s209 = sphi 0, %s208
      %s225 = sphi 0, %s209
      %s231 = sphi 0, %s233
      %s234 = sphi 0, %s231
      %s235 = sphi 0, %s234
      %s251 = sphi 0, %s235
      %s257 = sphi 0, %s259
      %s260 = sphi 0, %s257
      %s261 = sphi 0, %s260
      %s277 = sphi 0, %s261
      %s283 = sphi 0, %s285
      %s286 = sphi 0, %s283
      %s287 = sphi 0, %s286
      %s303 = sphi 0, %s287
      %s309 = sphi 0, %s311
      %s312 = sphi 0, %s309
      %s313 = sphi 0, %s312
      %s329 = sphi 0, %s313
      %s335 = sphi 0, %s337
      %s338 = sphi 0, %s335
      %s339 = sphi 0, %s338
      %s355 = sphi 0, %s339
      %s359 = sphi 0, %s359
      %s361 = sphi 0, %s359
      %s362 = sphi 0, %s361
      %s376 = sphi 0, %s362
      %s382 = sphi 0, %s384
      %s385 = sphi 0, %s382
      %s386 = sphi 0, %s385
      %s402 = sphi 0, %s386
    $region4: #{tpu_custom_call.1} parent=1 // loop_header_branch
      %24 = sbr.rel (%p22) target = $region8
    $region5: #{tpu_custom_call.1} parent=1 // loop_body
      %s26 = ssub.s32 %s21, 1
      %s27 = ssub.s32 %s21, 2
      %s34 = sadd.s32 1, %s29
      %p35 = scmp.ge.s32.totalorder %s34, 2
      %s36 = scalar_select %p35, 0, %s34
      %s37 = sadd.s32 1, %s28
      %s38 = scalar_select %p35, %s37, %s28
      %p39 = scmp.ge.s32.totalorder %s38, 1
      %s40 = scalar_select %p39, 0, %s38
      %s41 = ssub.s32 %s28, %s40
      %p42 = scmp.eq.s32.totalorder %s41, 0
      %s44 = sadd.s32 %s43, 1
      %s45 = scalar_select %p42, %s43, %s44
      %p48 = pneg %p42
      %p49 = scmp.eq.s32.totalorder %s21, 1
      %p50 = por %p48, %p49
      %p51 = scmp.ne.s32.totalorder %s43, %s46
      %p52 = scmp.eq.s32.totalorder %s21, 0
      %p53 = por %p51, %p52
      %p54 = scmp.ne.s32.totalorder %s43, %s46
      %p55 = scmp.eq.s32.totalorder %s26, 1
      %p56 = por %p54, %p55
      %p57 = scmp.ne.s32.totalorder %s46, %s47
      %p58 = scmp.eq.s32.totalorder %s26, 0
      %p59 = por %p57, %p58
      %p60 = scmp.ne.s32.totalorder %s46, %s47
      %p61 = scmp.eq.s32.totalorder %s27, 1
      %p62 = por %p60, %p61
      %p64 = scmp.ne.s32.totalorder %s47, %s63
      %p65 = scmp.eq.s32.totalorder %s27, 0
      %p66 = por %p64, %p65
      %s67 = ssub.s32 %s28, %s40
      %p68 = scmp.eq.s32.totalorder %s67, 0
      %s70 = sadd.s32 %s69, 1
      %s71 = scalar_select %p68, %s69, %s70
      %p74 = pneg %p68
      %p75 = scmp.eq.s32.totalorder %s21, 1
      %p76 = por %p74, %p75
      %p77 = scmp.ne.s32.totalorder %s69, %s72
      %p78 = scmp.eq.s32.totalorder %s21, 0
      %p79 = por %p77, %p78
      %p80 = scmp.ne.s32.totalorder %s69, %s72
      %p81 = scmp.eq.s32.totalorder %s26, 1
      %p82 = por %p80, %p81
      %p83 = scmp.ne.s32.totalorder %s72, %s73
      %p84 = scmp.eq.s32.totalorder %s26, 0
      %p85 = por %p83, %p84
      %p86 = scmp.ne.s32.totalorder %s72, %s73
      %p87 = scmp.eq.s32.totalorder %s27, 1
      %p88 = por %p86, %p87
      %p90 = scmp.ne.s32.totalorder %s73, %s89
      %p91 = scmp.eq.s32.totalorder %s27, 0
      %p92 = por %p90, %p91
      %s94 = sadd.s32 %s93, 1
      %p97 = scmp.eq.s32.totalorder %s21, 1
      %p98 = scmp.ne.s32.totalorder %s93, %s95
      %p99 = scmp.eq.s32.totalorder %s21, 0
      %p100 = por %p98, %p99
      %p101 = scmp.ne.s32.totalorder %s93, %s95
      %p102 = scmp.eq.s32.totalorder %s26, 1
      %p103 = por %p101, %p102
      %p104 = scmp.ne.s32.totalorder %s95, %s96
      %p105 = scmp.eq.s32.totalorder %s26, 0
      %p106 = por %p104, %p105
      %p107 = scmp.ne.s32.totalorder %s95, %s96
      %p108 = scmp.eq.s32.totalorder %s27, 1
      %p109 = por %p107, %p108
      %p111 = scmp.ne.s32.totalorder %s96, %s110
      %p112 = scmp.eq.s32.totalorder %s27, 0
      %p113 = por %p111, %p112
      %s115 = sadd.s32 %s114, 1
      %p118 = scmp.eq.s32.totalorder %s21, 1
      %p119 = scmp.ne.s32.totalorder %s114, %s116
      %p120 = scmp.eq.s32.totalorder %s21, 0
      %p121 = por %p119, %p120
      %p122 = scmp.ne.s32.totalorder %s114, %s116
      %p123 = scmp.eq.s32.totalorder %s26, 1
      %p124 = por %p122, %p123
      %p125 = scmp.ne.s32.totalorder %s116, %s117
      %p126 = scmp.eq.s32.totalorder %s26, 0
      %p127 = por %p125, %p126
      %p128 = scmp.ne.s32.totalorder %s116, %s117
      %p129 = scmp.eq.s32.totalorder %s27, 1
      %p130 = por %p128, %p129
      %p132 = scmp.ne.s32.totalorder %s117, %s131
      %p133 = scmp.eq.s32.totalorder %s27, 0
      %p134 = por %p132, %p133
      %s136 = sadd.s32 %s135, 1
      %p139 = scmp.eq.s32.totalorder %s21, 1
      %p140 = scmp.ne.s32.totalorder %s135, %s137
      %p141 = scmp.eq.s32.totalorder %s21, 0
      %p142 = por %p140, %p141
      %p143 = scmp.ne.s32.totalorder %s135, %s137
      %p144 = scmp.eq.s32.totalorder %s26, 1
      %p145 = por %p143, %p144
      %p146 = scmp.ne.s32.totalorder %s137, %s138
      %p147 = scmp.eq.s32.totalorder %s26, 0
      %p148 = por %p146, %p147
      %p149 = scmp.ne.s32.totalorder %s137, %s138
      %p150 = scmp.eq.s32.totalorder %s27, 1
      %p151 = por %p149, %p150
      %p153 = scmp.ne.s32.totalorder %s138, %s152
      %p154 = scmp.eq.s32.totalorder %s27, 0
      %p155 = por %p153, %p154
      %s157 = sadd.s32 %s156, 1
      %p160 = scmp.eq.s32.totalorder %s21, 1
      %p161 = scmp.ne.s32.totalorder %s156, %s158
      %p162 = scmp.eq.s32.totalorder %s21, 0
      %p163 = por %p161, %p162
      %p164 = scmp.ne.s32.totalorder %s156, %s158
      %p165 = scmp.eq.s32.totalorder %s26, 1
      %p166 = por %p164, %p165
      %p167 = scmp.ne.s32.totalorder %s158, %s159
      %p168 = scmp.eq.s32.totalorder %s26, 0
      %p169 = por %p167, %p168
      %p170 = scmp.ne.s32.totalorder %s158, %s159
      %p171 = scmp.eq.s32.totalorder %s27, 1
      %p172 = por %p170, %p171
      %p174 = scmp.ne.s32.totalorder %s159, %s173
      %p175 = scmp.eq.s32.totalorder %s27, 0
      %p176 = por %p174, %p175
      %s177 = ssub.s32 %s29, %s36
      %p178 = scmp.eq.s32.totalorder %s177, 0
      %s180 = sadd.s32 %s179, 1
      %s181 = scalar_select %p178, %s179, %s180
      %p184 = pneg %p178
      %p185 = scmp.eq.s32.totalorder %s21, 1
      %p186 = por %p184, %p185
      %p187 = scmp.ne.s32.totalorder %s179, %s182
      %p188 = scmp.eq.s32.totalorder %s21, 0
      %p189 = por %p187, %p188
      %p190 = scmp.ne.s32.totalorder %s179, %s182
      %p191 = scmp.eq.s32.totalorder %s26, 1
      %p192 = por %p190, %p191
      %p193 = scmp.ne.s32.totalorder %s182, %s183
      %p194 = scmp.eq.s32.totalorder %s26, 0
      %p195 = por %p193, %p194
      %p196 = scmp.ne.s32.totalorder %s182, %s183
      %p197 = scmp.eq.s32.totalorder %s27, 1
      %p198 = por %p196, %p197
      %p200 = scmp.ne.s32.totalorder %s183, %s199
      %p201 = scmp.eq.s32.totalorder %s27, 0
      %p202 = por %p200, %p201
      %s203 = ssub.s32 %s29, %s36
      %p204 = scmp.eq.s32.totalorder %s203, 0
      %s206 = sadd.s32 %s205, 1
      %s207 = scalar_select %p204, %s205, %s206
      %p210 = pneg %p204
      %p211 = scmp.eq.s32.totalorder %s21, 1
      %p212 = por %p210, %p211
      %p213 = scmp.ne.s32.totalorder %s205, %s208
      %p214 = scmp.eq.s32.totalorder %s21, 0
      %p215 = por %p213, %p214
      %p216 = scmp.ne.s32.totalorder %s205, %s208
      %p217 = scmp.eq.s32.totalorder %s26, 1
      %p218 = por %p216, %p217
      %p219 = scmp.ne.s32.totalorder %s208, %s209
      %p220 = scmp.eq.s32.totalorder %s26, 0
      %p221 = por %p219, %p220
      %p222 = scmp.ne.s32.totalorder %s208, %s209
      %p223 = scmp.eq.s32.totalorder %s27, 1
      %p224 = por %p222, %p223
      %p226 = scmp.ne.s32.totalorder %s209, %s225
      %p227 = scmp.eq.s32.totalorder %s27, 0
      %p228 = por %p226, %p227
      %s229 = ssub.s32 %s29, %s36
      %p230 = scmp.eq.s32.totalorder %s229, 0
      %s232 = sadd.s32 %s231, 1
      %s233 = scalar_select %p230, %s231, %s232
      %p236 = pneg %p230
      %p237 = scmp.eq.s32.totalorder %s21, 1
      %p238 = por %p236, %p237
      %p239 = scmp.ne.s32.totalorder %s231, %s234
      %p240 = scmp.eq.s32.totalorder %s21, 0
      %p241 = por %p239, %p240
      %p242 = scmp.ne.s32.totalorder %s231, %s234
      %p243 = scmp.eq.s32.totalorder %s26, 1
      %p244 = por %p242, %p243
      %p245 = scmp.ne.s32.totalorder %s234, %s235
      %p246 = scmp.eq.s32.totalorder %s26, 0
      %p247 = por %p245, %p246
      %p248 = scmp.ne.s32.totalorder %s234, %s235
      %p249 = scmp.eq.s32.totalorder %s27, 1
      %p250 = por %p248, %p249
      %p252 = scmp.ne.s32.totalorder %s235, %s251
      %p253 = scmp.eq.s32.totalorder %s27, 0
      %p254 = por %p252, %p253
      %s255 = ssub.s32 %s29, %s36
      %p256 = scmp.eq.s32.totalorder %s255, 0
      %s258 = sadd.s32 %s257, 1
      %s259 = scalar_select %p256, %s257, %s258
      %p262 = pneg %p256
      %p263 = scmp.eq.s32.totalorder %s21, 1
      %p264 = por %p262, %p263
      %p265 = scmp.ne.s32.totalorder %s257, %s260
      %p266 = scmp.eq.s32.totalorder %s21, 0
      %p267 = por %p265, %p266
      %p268 = scmp.ne.s32.totalorder %s257, %s260
      %p269 = scmp.eq.s32.totalorder %s26, 1
      %p270 = por %p268, %p269
      %p271 = scmp.ne.s32.totalorder %s260, %s261
      %p272 = scmp.eq.s32.totalorder %s26, 0
      %p273 = por %p271, %p272
      %p274 = scmp.ne.s32.totalorder %s260, %s261
      %p275 = scmp.eq.s32.totalorder %s27, 1
      %p276 = por %p274, %p275
      %p278 = scmp.ne.s32.totalorder %s261, %s277
      %p279 = scmp.eq.s32.totalorder %s27, 0
      %p280 = por %p278, %p279
      %s281 = ssub.s32 %s29, %s36
      %p282 = scmp.eq.s32.totalorder %s281, 0
      %s284 = sadd.s32 %s283, 1
      %s285 = scalar_select %p282, %s283, %s284
      %p288 = pneg %p282
      %p289 = scmp.eq.s32.totalorder %s21, 1
      %p290 = por %p288, %p289
      %p291 = scmp.ne.s32.totalorder %s283, %s286
      %p292 = scmp.eq.s32.totalorder %s21, 0
      %p293 = por %p291, %p292
      %p294 = scmp.ne.s32.totalorder %s283, %s286
      %p295 = scmp.eq.s32.totalorder %s26, 1
      %p296 = por %p294, %p295
      %p297 = scmp.ne.s32.totalorder %s286, %s287
      %p298 = scmp.eq.s32.totalorder %s26, 0
      %p299 = por %p297, %p298
      %p300 = scmp.ne.s32.totalorder %s286, %s287
      %p301 = scmp.eq.s32.totalorder %s27, 1
      %p302 = por %p300, %p301
      %p304 = scmp.ne.s32.totalorder %s287, %s303
      %p305 = scmp.eq.s32.totalorder %s27, 0
      %p306 = por %p304, %p305
      %s307 = ssub.s32 %s29, %s36
      %p308 = scmp.eq.s32.totalorder %s307, 0
      %s310 = sadd.s32 %s309, 1
      %s311 = scalar_select %p308, %s309, %s310
      %p314 = pneg %p308
      %p315 = scmp.eq.s32.totalorder %s21, 1
      %p316 = por %p314, %p315
      %p317 = scmp.ne.s32.totalorder %s309, %s312
      %p318 = scmp.eq.s32.totalorder %s21, 0
      %p319 = por %p317, %p318
      %p320 = scmp.ne.s32.totalorder %s309, %s312
      %p321 = scmp.eq.s32.totalorder %s26, 1
      %p322 = por %p320, %p321
      %p323 = scmp.ne.s32.totalorder %s312, %s313
      %p324 = scmp.eq.s32.totalorder %s26, 0
      %p325 = por %p323, %p324
      %p326 = scmp.ne.s32.totalorder %s312, %s313
      %p327 = scmp.eq.s32.totalorder %s27, 1
      %p328 = por %p326, %p327
      %p330 = scmp.ne.s32.totalorder %s313, %s329
      %p331 = scmp.eq.s32.totalorder %s27, 0
      %p332 = por %p330, %p331
      %s333 = ssub.s32 %s29, %s36
      %p334 = scmp.eq.s32.totalorder %s333, 0
      %s336 = sadd.s32 %s335, 1
      %s337 = scalar_select %p334, %s335, %s336
      %p340 = pneg %p334
      %p341 = scmp.eq.s32.totalorder %s21, 1
      %p342 = por %p340, %p341
      %p343 = scmp.ne.s32.totalorder %s335, %s338
      %p344 = scmp.eq.s32.totalorder %s21, 0
      %p345 = por %p343, %p344
      %p346 = scmp.ne.s32.totalorder %s335, %s338
      %p347 = scmp.eq.s32.totalorder %s26, 1
      %p348 = por %p346, %p347
      %p349 = scmp.ne.s32.totalorder %s338, %s339
      %p350 = scmp.eq.s32.totalorder %s26, 0
      %p351 = por %p349, %p350
      %p352 = scmp.ne.s32.totalorder %s338, %s339
      %p353 = scmp.eq.s32.totalorder %s27, 1
      %p354 = por %p352, %p353
      %p356 = scmp.ne.s32.totalorder %s339, %s355
      %p357 = scmp.eq.s32.totalorder %s27, 0
      %p358 = por %p356, %p357
      %s360 = sadd.s32 %s359, 1
      %p363 = scmp.eq.s32.totalorder %s21, 1
      %p364 = scmp.ne.s32.totalorder %s359, %s361
      %p365 = scmp.eq.s32.totalorder %s21, 0
      %p366 = por %p364, %p365
      %p367 = scmp.ne.s32.totalorder %s359, %s361
      %p368 = scmp.eq.s32.totalorder %s26, 1
      %p369 = por %p367, %p368
      %p370 = scmp.ne.s32.totalorder %s361, %s362
      %p371 = scmp.eq.s32.totalorder %s26, 0
      %p372 = por %p370, %p371
      %p373 = scmp.ne.s32.totalorder %s361, %s362
      %p374 = scmp.eq.s32.totalorder %s27, 1
      %p375 = por %p373, %p374
      %p377 = scmp.ne.s32.totalorder %s362, %s376
      %p378 = scmp.eq.s32.totalorder %s27, 0
      %p379 = por %p377, %p378
      %s380 = ssub.s32 %s28, %s40
      %p381 = scmp.eq.s32.totalorder %s380, 0
      %s383 = sadd.s32 %s382, 1
      %s384 = scalar_select %p381, %s382, %s383
      %p387 = pneg %p381
      %p388 = scmp.eq.s32.totalorder %s21, 1
      %p389 = por %p387, %p388
      %p390 = scmp.ne.s32.totalorder %s382, %s385
      %p391 = scmp.eq.s32.totalorder %s21, 0
      %p392 = por %p390, %p391
      %p393 = scmp.ne.s32.totalorder %s382, %s385
      %p394 = scmp.eq.s32.totalorder %s26, 1
      %p395 = por %p393, %p394
      %p396 = scmp.ne.s32.totalorder %s385, %s386
      %p397 = scmp.eq.s32.totalorder %s26, 0
      %p398 = por %p396, %p397
      %p399 = scmp.ne.s32.totalorder %s385, %s386
      %p400 = scmp.eq.s32.totalorder %s27, 1
      %p401 = por %p399, %p400
      %p403 = scmp.ne.s32.totalorder %s386, %s402
      %p404 = scmp.eq.s32.totalorder %s27, 0
      %p405 = por %p403, %p404
      %p406 = scmp.le.s32.totalorder 1, %s21
      %p407 = scmp.lt.s32.totalorder %s21, 3
      %p408 = pnand %p406, %p407
      %p409 = pneg %p408
      // Predicated region
      $region9: #{tpu_custom_call.1} parent=5 // pred_check
        _
      $region10: #{tpu_custom_call.1} parent=5 // pred_check_branch
        %411 = sbr.rel (%p408) target = $region12
      $region11: #{tpu_custom_call.1} parent=5 // pred_region
        %s412 = ssub.s32 %s21, 1
        // Predicated region
        $region13: #{tpu_custom_call.1} parent=11 // pred_check
          %p413 = pneg %p59
        $region14: #{tpu_custom_call.1} parent=11 // pred_check_branch
          %415 = sbr.rel (%p413) target = $region16
        $region15: #{tpu_custom_call.1} parent=11 // pred_region
          %s416 = smul.u32 2, %s30
          %p417 = scmp.lt.s32.totalorder %s416, 1
          %s418 = scalar_select %p417, %s416, 1
          %s419 = smul.addr %s418, 2
          %s420 = smul.addr %s419, 8
          %s421 = scalar_lea.vmem %s0, %s420
          %s422 = smul.u32 2, %s30
        $region16: #{tpu_custom_call.1} parent=11 // pred_fallthru
          _
        // Predicated region
        $region17: #{tpu_custom_call.1} parent=11 // pred_check
          %p423 = pneg %p85
        $region18: #{tpu_custom_call.1} parent=11 // pred_check_branch
          %425 = sbr.rel (%p423) target = $region20
        $region19: #{tpu_custom_call.1} parent=11 // pred_region
          %s426 = smul.u32 2, %s30
          %p427 = scmp.lt.s32.totalorder %s426, 1
          %s428 = scalar_select %p427, %s426, 1
          %s429 = smul.addr %s428, 8
          %s430 = scalar_lea.vmem %s1, %s429
          %s431 = smul.u32 2, %s30
        $region20: #{tpu_custom_call.1} parent=11 // pred_fallthru
          _
        // Predicated region
        $region21: #{tpu_custom_call.1} parent=11 // pred_check
          %p432 = pneg %p106
        $region22: #{tpu_custom_call.1} parent=11 // pred_check_branch
          %434 = sbr.rel (%p432) target = $region24
        $region23: #{tpu_custom_call.1} parent=11 // pred_region
          _
        $region24: #{tpu_custom_call.1} parent=11 // pred_fallthru
          _
        // Predicated region
        $region25: #{tpu_custom_call.1} parent=11 // pred_check
          %p435 = pneg %p127
        $region26: #{tpu_custom_call.1} parent=11 // pred_check_branch
          %437 = sbr.rel (%p435) target = $region28
        $region27: #{tpu_custom_call.1} parent=11 // pred_region
          _
        $region28: #{tpu_custom_call.1} parent=11 // pred_fallthru
          _
        // Predicated region
        $region29: #{tpu_custom_call.1} parent=11 // pred_check
          %p438 = pneg %p148
        $region30: #{tpu_custom_call.1} parent=11 // pred_check_branch
          %440 = sbr.rel (%p438) target = $region32
        $region31: #{tpu_custom_call.1} parent=11 // pred_region
          _
        $region32: #{tpu_custom_call.1} parent=11 // pred_fallthru
          _
        // Predicated region
        $region33: #{tpu_custom_call.1} parent=11 // pred_check
          %p441 = pneg %p169
        $region34: #{tpu_custom_call.1} parent=11 // pred_check_branch
          %443 = sbr.rel (%p441) target = $region36
        $region35: #{tpu_custom_call.1} parent=11 // pred_region
          _
        $region36: #{tpu_custom_call.1} parent=11 // pred_fallthru
          _
        // Predicated region
        $region37: #{tpu_custom_call.1} parent=11 // pred_check
          %p444 = pneg %p372
        $region38: #{tpu_custom_call.1} parent=11 // pred_check_branch
          %446 = sbr.rel (%p444) target = $region40
        $region39: #{tpu_custom_call.1} parent=11 // pred_region
          _
        $region40: #{tpu_custom_call.1} parent=11 // pred_fallthru
          _
      $region12: #{tpu_custom_call.1} parent=5 // pred_fallthru
        _
      %p447 = scmp.lt.s32.totalorder %s21, 2
      // Predicated region
      $region41: #{tpu_custom_call.1} parent=5 // pred_check
        %p448 = pneg %p447
      $region42: #{tpu_custom_call.1} parent=5 // pred_check_branch
        %450 = sbr.rel (%p448) target = $region44
      $region43: #{tpu_custom_call.1} parent=5 // pred_region
        // Predicated region
        $region45: #{tpu_custom_call.1} parent=43 // pred_check
          %p451 = pneg %p189
        $region46: #{tpu_custom_call.1} parent=43 // pred_check_branch
          %453 = sbr.rel (%p451) target = $region48
        $region47: #{tpu_custom_call.1} parent=43 // pred_region
          %p454 = scmp.lt.s32.totalorder %s29, 1
          %s455 = scalar_select %p454, %s29, 1
          %s456 = smul.addr %s455, 4
          %s457 = smul.addr %s456, 8
          %s458 = scalar_lea.vmem %s6, %s457
        $region48: #{tpu_custom_call.1} parent=43 // pred_fallthru
          _
        // Predicated region
        $region49: #{tpu_custom_call.1} parent=43 // pred_check
          %p459 = pneg %p215
        $region50: #{tpu_custom_call.1} parent=43 // pred_check_branch
          %461 = sbr.rel (%p459) target = $region52
        $region51: #{tpu_custom_call.1} parent=43 // pred_region
          %p462 = scmp.lt.s32.totalorder %s29, 1
          %s463 = scalar_select %p462, %s29, 1
          %s464 = scalar_lea.vmem %s7, %s463
        $region52: #{tpu_custom_call.1} parent=43 // pred_fallthru
          _
        // Predicated region
        $region53: #{tpu_custom_call.1} parent=43 // pred_check
          %p465 = pneg %p241
        $region54: #{tpu_custom_call.1} parent=43 // pred_check_branch
          %467 = sbr.rel (%p465) target = $region56
        $region55: #{tpu_custom_call.1} parent=43 // pred_region
          %p468 = scmp.lt.s32.totalorder %s29, 1
          %s469 = scalar_select %p468, %s29, 1
          %s470 = smul.addr %s469, 4
          %s471 = smul.addr %s470, 8
          %s472 = scalar_lea.vmem %s8, %s471
        $region56: #{tpu_custom_call.1} parent=43 // pred_fallthru
          _
        // Predicated region
        $region57: #{tpu_custom_call.1} parent=43 // pred_check
          %p473 = pneg %p267
        $region58: #{tpu_custom_call.1} parent=43 // pred_check_branch
          %475 = sbr.rel (%p473) target = $region60
        $region59: #{tpu_custom_call.1} parent=43 // pred_region
          %p476 = scmp.lt.s32.totalorder %s29, 1
          %s477 = scalar_select %p476, %s29, 1
          %s478 = scalar_lea.vmem %s9, %s477
        $region60: #{tpu_custom_call.1} parent=43 // pred_fallthru
          _
        // Predicated region
        $region61: #{tpu_custom_call.1} parent=43 // pred_check
          %p479 = pneg %p293
        $region62: #{tpu_custom_call.1} parent=43 // pred_check_branch
          %481 = sbr.rel (%p479) target = $region64
        $region63: #{tpu_custom_call.1} parent=43 // pred_region
          %p482 = scmp.lt.s32.totalorder %s29, 1
          %s483 = scalar_select %p482, %s29, 1
          %s484 = smul.addr %s483, 4
          %s485 = smul.addr %s484, 8
          %s486 = scalar_lea.vmem %s10, %s485
        $region64: #{tpu_custom_call.1} parent=43 // pred_fallthru
          _
        // Predicated region
        $region65: #{tpu_custom_call.1} parent=43 // pred_check
          %p487 = pneg %p319
        $region66: #{tpu_custom_call.1} parent=43 // pred_check_branch
          %489 = sbr.rel (%p487) target = $region68
        $region67: #{tpu_custom_call.1} parent=43 // pred_region
          %p490 = scmp.lt.s32.totalorder %s29, 1
          %s491 = scalar_select %p490, %s29, 1
          %s492 = scalar_lea.vmem %s11, %s491
        $region68: #{tpu_custom_call.1} parent=43 // pred_fallthru
          _
        // Predicated region
        $region69: #{tpu_custom_call.1} parent=43 // pred_check
          %p493 = pneg %p345
        $region70: #{tpu_custom_call.1} parent=43 // pred_check_branch
          %495 = sbr.rel (%p493) target = $region72
        $region71: #{tpu_custom_call.1} parent=43 // pred_region
          %p496 = scmp.lt.s32.totalorder %s29, 1
          %s497 = scalar_select %p496, %s29, 1
          %s498 = smul.addr %s497, 16
          %s499 = smul.addr %s498, 8
          %s500 = scalar_lea.vmem %s12, %s499
        $region72: #{tpu_custom_call.1} parent=43 // pred_fallthru
          _
      $region44: #{tpu_custom_call.1} parent=5 // pred_fallthru
        _
      %p501 = scmp.le.s32.totalorder 1, %s21
      %p502 = scmp.lt.s32.totalorder %s21, 3
      %p503 = pnand %p501, %p502
      %p504 = pneg %p503
      // Predicated region
      $region73: #{tpu_custom_call.1} parent=5 // pred_check
        _
      $region74: #{tpu_custom_call.1} parent=5 // pred_check_branch
        %506 = sbr.rel (%p503) target = $region76
      $region75: #{tpu_custom_call.1} parent=5 // pred_region
        %s507 = ssub.s32 %s21, 1
        %s508 = smul.u32 2, %s30
        %p509 = scmp.lt.s32.totalorder %s508, 1
        %s510 = scalar_select %p509, %s508, 1
        %s511 = smul.addr %s510, 2
        %s512 = smul.addr %s511, 8
        %s513 = scalar_lea.vmem %s0, %s512
        %p514 = pneg %p59
        %p515 = pneg %p56
        %s516 = smul.u32 2, %s30
        %p517 = scmp.lt.s32.totalorder %s516, 1
        %s518 = scalar_select %p517, %s516, 1
        %s519 = smul.addr %s518, 8
        %s520 = scalar_lea.vmem %s1, %s519
        %p521 = pneg %p85
        %p522 = pneg %p82
        %p523 = pneg %p106
        %p524 = pneg %p103
        %p525 = pneg %p127
        %p526 = pneg %p124
        %p527 = pneg %p148
        %p528 = pneg %p145
        %p529 = pneg %p169
        %p530 = pneg %p166
        %p531 = scmp.lt.s32.totalorder %s31, 1
        %s532 = scalar_select %p531, %s31, 1
        %s533 = smul.addr %s532, 4
        %s534 = smul.addr %s533, 8
        %s535 = scalar_lea.vmem %s6, %s534
        %p536 = pneg %p195
        %p537 = pneg %p192
        %p538 = scmp.lt.s32.totalorder %s31, 1
        %s539 = scalar_select %p538, %s31, 1
        %s540 = scalar_lea.vmem %s7, %s539
        %p541 = pneg %p221
        %p542 = pneg %p218
        %p543 = scmp.lt.s32.totalorder %s31, 1
        %s544 = scalar_select %p543, %s31, 1
        %s545 = smul.addr %s544, 4
        %s546 = smul.addr %s545, 8
        %s547 = scalar_lea.vmem %s8, %s546
        %p548 = pneg %p247
        %p549 = pneg %p244
        %p550 = scmp.lt.s32.totalorder %s31, 1
        %s551 = scalar_select %p550, %s31, 1
        %s552 = scalar_lea.vmem %s9, %s551
        %p553 = pneg %p273
        %p554 = pneg %p270
        %p555 = scmp.lt.s32.totalorder %s31, 1
        %s556 = scalar_select %p555, %s31, 1
        %s557 = smul.addr %s556, 4
        %s558 = smul.addr %s557, 8
        %s559 = scalar_lea.vmem %s10, %s558
        %p560 = pneg %p299
        %p561 = pneg %p296
        %p562 = scmp.lt.s32.totalorder %s31, 1
        %s563 = scalar_select %p562, %s31, 1
        %s564 = scalar_lea.vmem %s11, %s563
        %p565 = pneg %p325
        %p566 = pneg %p322
        %p567 = scmp.lt.s32.totalorder %s31, 1
        %s568 = scalar_select %p567, %s31, 1
        %s569 = smul.addr %s568, 16
        %s570 = smul.addr %s569, 8
        %s571 = scalar_lea.vmem %s12, %s570
        %p572 = pneg %p351
        %p573 = pneg %p348
        %p574 = pneg %p372
        %p575 = pneg %p369
        %p576 = pneg %p398
        %p577 = pneg %p395
        %s578 = smul.u32 2, %s30
        %p579 = scmp.lt.s32.totalorder %s578, 1
        %s580 = scalar_select %p579, %s578, 1
        %s581 = smul.addr %s580, 2
        %s582 = smul.addr %s581, 8
        %s583 = scalar_lea.vmem %s0, %s582
        %s584 = smul.u32 2, %s30
        %s585 = smul.u32 2, %s30
        %p586 = scmp.lt.s32.totalorder %s585, 1
        %s587 = scalar_select %p586, %s585, 1
        %s588 = smul.addr %s587, 8
        %s589 = scalar_lea.vmem %s1, %s588
        %s590 = smul.u32 2, %s30
        %p591 = scmp.lt.s32.totalorder %s31, 1
        %s592 = scalar_select %p591, %s31, 1
        %s593 = smul.addr %s592, 4
        %s594 = smul.addr %s593, 8
        %s595 = scalar_lea.vmem %s6, %s594
        %p596 = scmp.lt.s32.totalorder %s31, 1
        %s597 = scalar_select %p596, %s31, 1
        %s598 = scalar_lea.vmem %s7, %s597
        %p599 = scmp.lt.s32.totalorder %s31, 1
        %s600 = scalar_select %p599, %s31, 1
        %s601 = smul.addr %s600, 4
        %s602 = smul.addr %s601, 8
        %s603 = scalar_lea.vmem %s8, %s602
        %p604 = scmp.lt.s32.totalorder %s31, 1
        %s605 = scalar_select %p604, %s31, 1
        %s606 = scalar_lea.vmem %s9, %s605
        %p607 = scmp.lt.s32.totalorder %s31, 1
        %s608 = scalar_select %p607, %s31, 1
        %s609 = smul.addr %s608, 4
        %s610 = smul.addr %s609, 8
        %s611 = scalar_lea.vmem %s10, %s610
        %p612 = scmp.lt.s32.totalorder %s31, 1
        %s613 = scalar_select %p612, %s31, 1
        %s614 = scalar_lea.vmem %s11, %s613
        %p615 = scmp.lt.s32.totalorder %s31, 1
        %s616 = scalar_select %p615, %s31, 1
        %s617 = smul.addr %s616, 16
        %s618 = smul.addr %s617, 8
        %s619 = scalar_lea.vmem %s12, %s618
        %s620 = smul.u32 2, %s30
        %p621 = scmp.eq.s32.totalorder %s31, 0
        // Predicated region
        $region77: #{tpu_custom_call.1} parent=75 // pred_check
          %p622 = pneg %p621
        $region78: #{tpu_custom_call.1} parent=75 // pred_check_branch
          %624 = sbr.rel (%p622) target = $region80
        $region79: #{tpu_custom_call.1} parent=75 // pred_region
          %v625 = vld [vmem:[%s583] sm:$0xff]
          %v626 = vld [vmem:[%s583 + $0x8] sm:$0xff]
          %v627 = vld [vmem:[%s583 + $0x10] sm:$0xff]
          %v628 = vld [vmem:[%s583 + $0x18] sm:$0xff]
          %v629 = vld [vmem:[%s2] sm:$0x1]
          %v630 = vld [vmem:[%s3] sm:$0x1]
          %vm631 = vcmask 261120
          %v632 = vsel %vm631, %v625, 0.0
          %633 = vadd.xlane.f32.xlu0 %v632
          %v634 = vpop.xlane.xlu0 %633
          %v635 = vsel %vm631, %v626, 0.0
          %636 = vadd.xlane.f32.xlu0 %v635
          %v637 = vpop.xlane.xlu0 %636
          %v638 = vsel %vm631, %v627, 0.0
          %639 = vadd.xlane.f32.xlu0 %v638
          %v640 = vpop.xlane.xlu0 %639
          %v641 = vsel %vm631, %v628, 0.0
          %642 = vadd.xlane.f32.xlu0 %v641
          %v643 = vpop.xlane.xlu0 %642
          %v644 = vrcp.pop 32.0
          %v645 = vmul.f32 %v634, %v644
          %v646 = vmul.f32 %v637, %v644
          %v647 = vmul.f32 %v640, %v644
          %v648 = vmul.f32 %v643, %v644
          %v649 = vsub.f32 %v625, %v645
          %v650 = vsub.f32 %v626, %v646
          %v651 = vsub.f32 %v627, %v647
          %v652 = vsub.f32 %v628, %v648
          %v653 = vmul.f32 %v649, %v649
          %v654 = vmul.f32 %v650, %v650
          %v655 = vmul.f32 %v651, %v651
          %v656 = vmul.f32 %v652, %v652
          %v657 = vsel %vm631, %v653, 0.0
          %658 = vadd.xlane.f32.xlu0 %v657
          %v659 = vpop.xlane.xlu0 %658
          %v660 = vsel %vm631, %v654, 0.0
          %661 = vadd.xlane.f32.xlu0 %v660
          %v662 = vpop.xlane.xlu0 %661
          %v663 = vsel %vm631, %v655, 0.0
          %664 = vadd.xlane.f32.xlu0 %v663
          %v665 = vpop.xlane.xlu0 %664
          %v666 = vsel %vm631, %v656, 0.0
          %667 = vadd.xlane.f32.xlu0 %v666
          %v668 = vpop.xlane.xlu0 %667
          %v669 = vmul.f32 %v659, %v644
          %v670 = vmul.f32 %v662, %v644
          %v671 = vmul.f32 %v665, %v644
          %v672 = vmul.f32 %v668, %v644
          %v673 = vadd.f32 %v669, 1e-05
          %v674 = vadd.f32 %v670, 1e-05
          %v675 = vadd.f32 %v671, 1e-05
          %v676 = vadd.f32 %v672, 1e-05
          %v677 = vrsqrt.pop %v673
          %v678 = vrsqrt.pop %v674
          %v679 = vrsqrt.pop %v675
          %v680 = vrsqrt.pop %v676
          %v681 = vmul.f32 %v649, %v677
          %v682 = vmul.f32 %v650, %v678
          %v683 = vmul.f32 %v651, %v679
          %v684 = vmul.f32 %v652, %v680
          %v686 = vlaneseq
          %v687 = vshrl.u32 %v686, 7
          %v688 = vsub.s32 0, %v687
          %v689 = vrot.slane %v629, %v688
          %v691 = vmul.f32 %v681, %v689
          %v692 = vmul.f32 %v682, %v689
          %v693 = vmul.f32 %v683, %v689
          %v694 = vmul.f32 %v684, %v689
          %v696 = vlaneseq
          %v697 = vshrl.u32 %v696, 7
          %v698 = vsub.s32 0, %v697
          %v699 = vrot.slane %v630, %v698
          %v701 = vadd.f32 %v691, %v699
          %v702 = vadd.f32 %v692, %v699
          %v703 = vadd.f32 %v693, %v699
          %v704 = vadd.f32 %v694, %v699
          %705 = vst.msk [vmem:[#allocation2] sm:$0xff] %vm631, %v701
          %706 = vst.msk [vmem:[#allocation2 + $0x8] sm:$0xff] %vm631, %v702
          %707 = vst.msk [vmem:[#allocation2 + $0x10] sm:$0xff] %vm631, %v703
          %708 = vst.msk [vmem:[#allocation2 + $0x18] sm:$0xff] %vm631, %v704
          %v709 = vld [vmem:[%s589] sm:$0xff]
          %v710 = vld [vmem:[%s589 + $0x8] sm:$0xff]
          %v711 = vld [vmem:[%s4] sm:$0x1]
          %v712 = vld [vmem:[%s5] sm:$0x1]
          %v713 = vsel %vm631, %v709, 0.0
          %714 = vadd.xlane.f32.xlu0 %v713
          %v715 = vpop.xlane.xlu0 %714
          %v716 = vsel %vm631, %v710, 0.0
          %717 = vadd.xlane.f32.xlu0 %v716
          %v718 = vpop.xlane.xlu0 %717
          %v719 = vmul.f32 %v715, %v644
          %v720 = vmul.f32 %v718, %v644
          %v721 = vsub.f32 %v709, %v719
          %v722 = vsub.f32 %v710, %v720
          %v723 = vmul.f32 %v721, %v721
          %v724 = vmul.f32 %v722, %v722
          %v725 = vsel %vm631, %v723, 0.0
          %726 = vadd.xlane.f32.xlu0 %v725
          %v727 = vpop.xlane.xlu0 %726
          %v728 = vsel %vm631, %v724, 0.0
          %729 = vadd.xlane.f32.xlu0 %v728
          %v730 = vpop.xlane.xlu0 %729
          %v731 = vmul.f32 %v727, %v644
          %v732 = vmul.f32 %v730, %v644
          %v733 = vadd.f32 %v731, 1e-05
          %v734 = vadd.f32 %v732, 1e-05
          %v735 = vrsqrt.pop %v733
          %v736 = vrsqrt.pop %v734
          %v737 = vmul.f32 %v721, %v735
          %v738 = vmul.f32 %v722, %v736
          %v740 = vlaneseq
          %v741 = vshrl.u32 %v740, 7
          %v742 = vsub.s32 0, %v741
          %v743 = vrot.slane %v711, %v742
          %v745 = vmul.f32 %v737, %v743
          %v746 = vmul.f32 %v738, %v743
          %v748 = vlaneseq
          %v749 = vshrl.u32 %v748, 7
          %v750 = vsub.s32 0, %v749
          %v751 = vrot.slane %v712, %v750
          %v753 = vadd.f32 %v745, %v751
          %v754 = vadd.f32 %v746, %v751
          %755 = vst.msk [vmem:[#allocation3] sm:$0xff] %vm631, %v753
          %756 = vst.msk [vmem:[#allocation3 + $0x8] sm:$0xff] %vm631, %v754
          %757 = vst.msk [vmem:[#allocation4] sm:$0xff] %vm631, 0.0
          %758 = vst.msk [vmem:[#allocation4 + $0x8] sm:$0xff] %vm631, 0.0
        $region80: #{tpu_custom_call.1} parent=75 // pred_fallthru
          _
        %v759 = vld [vmem:[#allocation2] sm:$0xff]
        %v760 = vld [vmem:[#allocation2 + $0x8] sm:$0xff]
        %v761 = vld [vmem:[#allocation2 + $0x10] sm:$0xff]
        %v762 = vld [vmem:[#allocation2 + $0x18] sm:$0xff]
        %v763 = vld [vmem:[#allocation3] sm:$0xff]
        %v764 = vld [vmem:[#allocation3 + $0x8] sm:$0xff]
        %v765 = vld [vmem:[%s595] sm:$0xff]
        %v766 = vld [vmem:[%s595 + $0x8] sm:$0xff]
        %v767 = vld [vmem:[%s595 + $0x10] sm:$0xff]
        %v768 = vld [vmem:[%s595 + $0x18] sm:$0xff]
        %v769 = vld [vmem:[%s603] sm:$0xff]
        %v770 = vld [vmem:[%s603 + $0x8] sm:$0xff]
        %v771 = vld [vmem:[%s603 + $0x10] sm:$0xff]
        %v772 = vld [vmem:[%s603 + $0x18] sm:$0xff]
        %v773 = vld [vmem:[%s611] sm:$0xff]
        %v774 = vld [vmem:[%s611 + $0x8] sm:$0xff]
        %v775 = vld [vmem:[%s611 + $0x10] sm:$0xff]
        %v776 = vld [vmem:[%s611 + $0x18] sm:$0xff]
        %v777 = vld [vmem:[%s598] sm:$0x1]
        %v779 = vlaneseq
        %v780 = vshrl.u32 %v779, 7
        %v781 = vsub.s32 0, %v780
        %v782 = vrot.slane %v777, %v781
        %vm784 = vcmask 261120
        %v786 = vsel %vm784, %v763, 0
        %v789 = vsel %vm784, %v764, 0
        %791 = vmatprep.subr.mxu0 0.0
        %792 = vmatpush1.msra.mxu0 %v765
        %793 = vmatprep.subr.mxu0 0.0
        %794 = vmatpush1.msra.mxu0 %v766
        %795 = vmatprep.subr.mxu0 0.0
        %796 = vmatpush1.msra.mxu0 %v767
        %797 = vmatprep.subr.mxu0 0.0
        %798 = vmatpush1.msra.mxu0 %v768
        %799 = vmatprep.subr.mxu0 0.0
        %800 = vmatpush1.msra.mxu0 0.0
        %801 = vmatprep.subr.mxu0 0.0
        %802 = vmatpush1.msra.mxu0 0.0
        %803 = vmatprep.subr.mxu0 0.0
        %804 = vmatpush1.msra.mxu0 0.0
        %805 = vmatprep.subr.mxu0 0.0
        %806 = vmatpush1.msra.mxu0 0.0
        %807 = vmatprep.subr.mxu0 0.0
        %808 = vmatpush1.msra.mxu0 0.0
        %809 = vmatprep.subr.mxu0 0.0
        %810 = vmatpush1.msra.mxu0 0.0
        %811 = vmatprep.subr.mxu0 0.0
        %812 = vmatpush1.msra.mxu0 0.0
        %813 = vmatprep.subr.mxu0 0.0
        %814 = vmatpush1.msra.mxu0 0.0
        %815 = vmatprep.subr.mxu0 0.0
        %816 = vmatpush1.msra.mxu0 0.0
        %817 = vmatprep.subr.mxu0 0.0
        %818 = vmatpush1.msra.mxu0 0.0
        %819 = vmatprep.subr.mxu0 0.0
        %820 = vmatpush1.msra.mxu0 0.0
        %821 = vmatprep.subr.mxu0 0.0
        %822 = vmatpush1.msra.mxu0 0.0
        %823 = vmatprep.subr.mxu0 0.0
        %824 = vmatpush1.msra.mxu0 0.0
        %825 = vmatprep.subr.mxu0 0.0
        %826 = vmatpush1.msra.mxu0 0.0
        %827 = vmatprep.subr.mxu0 0.0
        %828 = vmatpush1.msra.mxu0 0.0
        %829 = vmatprep.subr.mxu0 0.0
        %830 = vmatpush1.msra.mxu0 0.0
        %831 = vmatprep.subr.mxu0 0.0
        %832 = vmatpush1.msra.mxu0 0.0
        %833 = vmatprep.subr.mxu0 0.0
        %834 = vmatpush1.msra.mxu0 0.0
        %835 = vmatprep.subr.mxu0 0.0
        %836 = vmatpush1.msra.mxu0 0.0
        %837 = vmatprep.subr.mxu0 0.0
        %838 = vmatpush1.msra.mxu0 0.0
        %839 = vmatprep.subr.mxu0 0.0
        %840 = vmatpush1.msra.mxu0 0.0
        %841 = vmatprep.subr.mxu0 0.0
        %842 = vmatpush1.msra.mxu0 0.0
        %843 = vmatprep.subr.mxu0 0.0
        %844 = vmatpush1.msra.mxu0 0.0
        %845 = vmatprep.subr.mxu0 0.0
        %846 = vmatpush1.msra.mxu0 0.0
        %847 = vmatprep.subr.mxu0 0.0
        %848 = vmatpush1.msra.mxu0 0.0
        %849 = vmatprep.subr.mxu0 0.0
        %850 = vmatpush1.msra.mxu0 0.0
        %851 = vmatprep.subr.mxu0 0.0
        %852 = vmatpush1.msra.mxu0 0.0
        %853 = vmatprep.subr.mxu0 0.0
        %854 = vmatpush1.msra.mxu0 0.0
        %855 = vmatprep.mubr.f32.mxu0 0.0
        %856 = vmatmul.mubr.f32.gmra.mrb[0].mxu0 %v786
        %v857 = vpop.f32.mrb[0].mxu0
        %v858 = vadd.f32 %v782, %v857
        %v859 = vpop.f32.mrb[0].mxu0
        %860 = vmatprep.mubr.f32.mxu0 0.0
        %861 = vmatmul.mubr.f32.gmra.mrb[0].mxu0 %v789
        %v862 = vpop.f32.mrb[0].mxu0
        %v863 = vadd.f32 %v782, %v862
        %v864 = vpop.f32.mrb[0].mxu0
        %865 = vdwg.mxu0
        %v866 = vmul.f32 %v858, 0.088388346
        %v867 = vmul.f32 %v863, 0.088388346
        %v868 = vld [vmem:[%s606] sm:$0x1]
        %v870 = vlaneseq
        %v871 = vshrl.u32 %v870, 7
        %v872 = vsub.s32 0, %v871
        %v873 = vrot.slane %v868, %v872
        %v876 = vsel %vm784, %v759, 0
        %v879 = vsel %vm784, %v760, 0
        %v882 = vsel %vm784, %v761, 0
        %v885 = vsel %vm784, %v762, 0
        %887 = vmatprep.subr.mxu0 0.0
        %888 = vmatpush1.msra.mxu0 %v769
        %889 = vmatprep.subr.mxu0 0.0
        %890 = vmatpush1.msra.mxu0 %v770
        %891 = vmatprep.subr.mxu0 0.0
        %892 = vmatpush1.msra.mxu0 %v771
        %893 = vmatprep.subr.mxu0 0.0
        %894 = vmatpush1.msra.mxu0 %v772
        %895 = vmatprep.subr.mxu0 0.0
        %896 = vmatpush1.msra.mxu0 0.0
        %897 = vmatprep.subr.mxu0 0.0
        %898 = vmatpush1.msra.mxu0 0.0
        %899 = vmatprep.subr.mxu0 0.0
        %900 = vmatpush1.msra.mxu0 0.0
        %901 = vmatprep.subr.mxu0 0.0
        %902 = vmatpush1.msra.mxu0 0.0
        %903 = vmatprep.subr.mxu0 0.0
        %904 = vmatpush1.msra.mxu0 0.0
        %905 = vmatprep.subr.mxu0 0.0
        %906 = vmatpush1.msra.mxu0 0.0
        %907 = vmatprep.subr.mxu0 0.0
        %908 = vmatpush1.msra.mxu0 0.0
        %909 = vmatprep.subr.mxu0 0.0
        %910 = vmatpush1.msra.mxu0 0.0
        %911 = vmatprep.subr.mxu0 0.0
        %912 = vmatpush1.msra.mxu0 0.0
        %913 = vmatprep.subr.mxu0 0.0
        %914 = vmatpush1.msra.mxu0 0.0
        %915 = vmatprep.subr.mxu0 0.0
        %916 = vmatpush1.msra.mxu0 0.0
        %917 = vmatprep.subr.mxu0 0.0
        %918 = vmatpush1.msra.mxu0 0.0
        %919 = vmatprep.subr.mxu0 0.0
        %920 = vmatpush1.msra.mxu0 0.0
        %921 = vmatprep.subr.mxu0 0.0
        %922 = vmatpush1.msra.mxu0 0.0
        %923 = vmatprep.subr.mxu0 0.0
        %924 = vmatpush1.msra.mxu0 0.0
        %925 = vmatprep.subr.mxu0 0.0
        %926 = vmatpush1.msra.mxu0 0.0
        %927 = vmatprep.subr.mxu0 0.0
        %928 = vmatpush1.msra.mxu0 0.0
        %929 = vmatprep.subr.mxu0 0.0
        %930 = vmatpush1.msra.mxu0 0.0
        %931 = vmatprep.subr.mxu0 0.0
        %932 = vmatpush1.msra.mxu0 0.0
        %933 = vmatprep.subr.mxu0 0.0
        %934 = vmatpush1.msra.mxu0 0.0
        %935 = vmatprep.subr.mxu0 0.0
        %936 = vmatpush1.msra.mxu0 0.0
        %937 = vmatprep.subr.mxu0 0.0
        %938 = vmatpush1.msra.mxu0 0.0
        %939 = vmatprep.subr.mxu0 0.0
        %940 = vmatpush1.msra.mxu0 0.0
        %941 = vmatprep.subr.mxu0 0.0
        %942 = vmatpush1.msra.mxu0 0.0
        %943 = vmatprep.subr.mxu0 0.0
        %944 = vmatpush1.msra.mxu0 0.0
        %945 = vmatprep.subr.mxu0 0.0
        %946 = vmatpush1.msra.mxu0 0.0
        %947 = vmatprep.subr.mxu0 0.0
        %948 = vmatpush1.msra.mxu0 0.0
        %949 = vmatprep.subr.mxu0 0.0
        %950 = vmatpush1.msra.mxu0 0.0
        %951 = vmatprep.mubr.f32.mxu0 0.0
        %952 = vmatmul.mubr.f32.gmra.mrb[0].mxu0 %v876
        %v953 = vpop.f32.mrb[0].mxu0
        %v954 = vadd.f32 %v873, %v953
        %v955 = vpop.f32.mrb[0].mxu0
        %956 = vmatprep.mubr.f32.mxu0 0.0
        %957 = vmatmul.mubr.f32.gmra.mrb[0].mxu0 %v879
        %v958 = vpop.f32.mrb[0].mxu0
        %v959 = vadd.f32 %v873, %v958
        %v960 = vpop.f32.mrb[0].mxu0
        %961 = vmatprep.mubr.f32.mxu0 0.0
        %962 = vmatmul.mubr.f32.gmra.mrb[0].mxu0 %v882
        %v963 = vpop.f32.mrb[0].mxu0
        %v964 = vadd.f32 %v873, %v963
        %v965 = vpop.f32.mrb[0].mxu0
        %966 = vmatprep.mubr.f32.mxu0 0.0
        %967 = vmatmul.mubr.f32.gmra.mrb[0].mxu0 %v885
        %v968 = vpop.f32.mrb[0].mxu0
        %v969 = vadd.f32 %v873, %v968
        %v970 = vpop.f32.mrb[0].mxu0
        %971 = vdwg.mxu0
        %972 = vmatprep.subr.mxu0 0.0
        %973 = vmatpush1.msra.mxu0 %v769
        %974 = vmatprep.subr.mxu0 0.0
        %975 = vmatpush1.msra.mxu0 %v770
        %976 = vmatprep.subr.mxu0 0.0
        %977 = vmatpush1.msra.mxu0 %v771
        %978 = vmatprep.subr.mxu0 0.0
        %979 = vmatpush1.msra.mxu0 %v772
        %980 = vmatprep.subr.mxu0 0.0
        %981 = vmatpush1.msra.mxu0 0.0
        %982 = vmatprep.subr.mxu0 0.0
        %983 = vmatpush1.msra.mxu0 0.0
        %984 = vmatprep.subr.mxu0 0.0
        %985 = vmatpush1.msra.mxu0 0.0
        %986 = vmatprep.subr.mxu0 0.0
        %987 = vmatpush1.msra.mxu0 0.0
        %988 = vmatprep.subr.mxu0 0.0
        %989 = vmatpush1.msra.mxu0 0.0
        %990 = vmatprep.subr.mxu0 0.0
        %991 = vmatpush1.msra.mxu0 0.0
        %992 = vmatprep.subr.mxu0 0.0
        %993 = vmatpush1.msra.mxu0 0.0
        %994 = vmatprep.subr.mxu0 0.0
        %995 = vmatpush1.msra.mxu0 0.0
        %996 = vmatprep.subr.mxu0 0.0
        %997 = vmatpush1.msra.mxu0 0.0
        %998 = vmatprep.subr.mxu0 0.0
        %999 = vmatpush1.msra.mxu0 0.0
        %1000 = vmatprep.subr.mxu0 0.0
        %1001 = vmatpush1.msra.mxu0 0.0
        %1002 = vmatprep.subr.mxu0 0.0
        %1003 = vmatpush1.msra.mxu0 0.0
        %1004 = vmatprep.subr.mxu0 0.0
        %1005 = vmatpush1.msra.mxu0 0.0
        %1006 = vmatprep.subr.mxu0 0.0
        %1007 = vmatpush1.msra.mxu0 0.0
        %1008 = vmatprep.subr.mxu0 0.0
        %1009 = vmatpush1.msra.mxu0 0.0
        %1010 = vmatprep.subr.mxu0 0.0
        %1011 = vmatpush1.msra.mxu0 0.0
        %1012 = vmatprep.subr.mxu0 0.0
        %1013 = vmatpush1.msra.mxu0 0.0
        %1014 = vmatprep.subr.mxu0 0.0
        %1015 = vmatpush1.msra.mxu0 0.0
        %1016 = vmatprep.subr.mxu0 0.0
        %1017 = vmatpush1.msra.mxu0 0.0
        %1018 = vmatprep.subr.mxu0 0.0
        %1019 = vmatpush1.msra.mxu0 0.0
        %1020 = vmatprep.subr.mxu0 0.0
        %1021 = vmatpush1.msra.mxu0 0.0
        %1022 = vmatprep.subr.mxu0 0.0
        %1023 = vmatpush1.msra.mxu0 0.0
        %1024 = vmatprep.subr.mxu0 0.0
        %1025 = vmatpush1.msra.mxu0 0.0
        %1026 = vmatprep.subr.mxu0 0.0
        %1027 = vmatpush1.msra.mxu0 0.0
        %1028 = vmatprep.subr.mxu0 0.0
        %1029 = vmatpush1.msra.mxu0 0.0
        %1030 = vmatprep.subr.mxu0 0.0
        %1031 = vmatpush1.msra.mxu0 0.0
        %1032 = vmatprep.subr.mxu0 0.0
        %1033 = vmatpush1.msra.mxu0 0.0
        %1034 = vmatprep.subr.mxu0 0.0
        %1035 = vmatpush1.msra.mxu0 0.0
        %1036 = vmatprep.mubr.f32.mxu0 0.0
        %1037 = vmatmul.mubr.f32.gmra.mrb[0].mxu0 %v786
        %v1038 = vpop.f32.mrb[0].mxu0
        %v1039 = vadd.f32 %v873, %v1038
        %v1040 = vpop.f32.mrb[0].mxu0
        %1041 = vmatprep.mubr.f32.mxu0 0.0
        %1042 = vmatmul.mubr.f32.gmra.mrb[0].mxu0 %v789
        %v1043 = vpop.f32.mrb[0].mxu0
        %v1044 = vadd.f32 %v873, %v1043
        %v1045 = vpop.f32.mrb[0].mxu0
        %1046 = vdwg.mxu0
        %v1047 = vld [vmem:[%s614] sm:$0x1]
        %v1049 = vlaneseq
        %v1050 = vshrl.u32 %v1049, 7
        %v1051 = vsub.s32 0, %v1050
        %v1052 = vrot.slane %v1047, %v1051
        %1054 = vmatprep.subr.mxu0 0.0
        %1055 = vmatpush1.msra.mxu0 %v773
        %1056 = vmatprep.subr.mxu0 0.0
        %1057 = vmatpush1.msra.mxu0 %v774
        %1058 = vmatprep.subr.mxu0 0.0
        %1059 = vmatpush1.msra.mxu0 %v775
        %1060 = vmatprep.subr.mxu0 0.0
        %1061 = vmatpush1.msra.mxu0 %v776
        %1062 = vmatprep.subr.mxu0 0.0
        %1063 = vmatpush1.msra.mxu0 0.0
        %1064 = vmatprep.subr.mxu0 0.0
        %1065 = vmatpush1.msra.mxu0 0.0
        %1066 = vmatprep.subr.mxu0 0.0
        %1067 = vmatpush1.msra.mxu0 0.0
        %1068 = vmatprep.subr.mxu0 0.0
        %1069 = vmatpush1.msra.mxu0 0.0
        %1070 = vmatprep.subr.mxu0 0.0
        %1071 = vmatpush1.msra.mxu0 0.0
        %1072 = vmatprep.subr.mxu0 0.0
        %1073 = vmatpush1.msra.mxu0 0.0
        %1074 = vmatprep.subr.mxu0 0.0
        %1075 = vmatpush1.msra.mxu0 0.0
        %1076 = vmatprep.subr.mxu0 0.0
        %1077 = vmatpush1.msra.mxu0 0.0
        %1078 = vmatprep.subr.mxu0 0.0
        %1079 = vmatpush1.msra.mxu0 0.0
        %1080 = vmatprep.subr.mxu0 0.0
        %1081 = vmatpush1.msra.mxu0 0.0
        %1082 = vmatprep.subr.mxu0 0.0
        %1083 = vmatpush1.msra.mxu0 0.0
        %1084 = vmatprep.subr.mxu0 0.0
        %1085 = vmatpush1.msra.mxu0 0.0
        %1086 = vmatprep.subr.mxu0 0.0
        %1087 = vmatpush1.msra.mxu0 0.0
        %1088 = vmatprep.subr.mxu0 0.0
        %1089 = vmatpush1.msra.mxu0 0.0
        %1090 = vmatprep.subr.mxu0 0.0
        %1091 = vmatpush1.msra.mxu0 0.0
        %1092 = vmatprep.subr.mxu0 0.0
        %1093 = vmatpush1.msra.mxu0 0.0
        %1094 = vmatprep.subr.mxu0 0.0
        %1095 = vmatpush1.msra.mxu0 0.0
        %1096 = vmatprep.subr.mxu0 0.0
        %1097 = vmatpush1.msra.mxu0 0.0
        %1098 = vmatprep.subr.mxu0 0.0
        %1099 = vmatpush1.msra.mxu0 0.0
        %1100 = vmatprep.subr.mxu0 0.0
        %1101 = vmatpush1.msra.mxu0 0.0
        %1102 = vmatprep.subr.mxu0 0.0
        %1103 = vmatpush1.msra.mxu0 0.0
        %1104 = vmatprep.subr.mxu0 0.0
        %1105 = vmatpush1.msra.mxu0 0.0
        %1106 = vmatprep.subr.mxu0 0.0
        %1107 = vmatpush1.msra.mxu0 0.0
        %1108 = vmatprep.subr.mxu0 0.0
        %1109 = vmatpush1.msra.mxu0 0.0
        %1110 = vmatprep.subr.mxu0 0.0
        %1111 = vmatpush1.msra.mxu0 0.0
        %1112 = vmatprep.subr.mxu0 0.0
        %1113 = vmatpush1.msra.mxu0 0.0
        %1114 = vmatprep.subr.mxu0 0.0
        %1115 = vmatpush1.msra.mxu0 0.0
        %1116 = vmatprep.subr.mxu0 0.0
        %1117 = vmatpush1.msra.mxu0 0.0
        %1118 = vmatprep.mubr.f32.mxu0 0.0
        %1119 = vmatmul.mubr.f32.gmra.mrb[0].mxu0 %v876
        %v1120 = vpop.f32.mrb[0].mxu0
        %v1121 = vadd.f32 %v1052, %v1120
        %v1122 = vpop.f32.mrb[0].mxu0
        %1123 = vmatprep.mubr.f32.mxu0 0.0
        %1124 = vmatmul.mubr.f32.gmra.mrb[0].mxu0 %v879
        %v1125 = vpop.f32.mrb[0].mxu0
        %v1126 = vadd.f32 %v1052, %v1125
        %v1127 = vpop.f32.mrb[0].mxu0
        %1128 = vmatprep.mubr.f32.mxu0 0.0
        %1129 = vmatmul.mubr.f32.gmra.mrb[0].mxu0 %v882
        %v1130 = vpop.f32.mrb[0].mxu0
        %v1131 = vadd.f32 %v1052, %v1130
        %v1132 = vpop.f32.mrb[0].mxu0
        %1133 = vmatprep.mubr.f32.mxu0 0.0
        %1134 = vmatmul.mubr.f32.gmra.mrb[0].mxu0 %v885
        %v1135 = vpop.f32.mrb[0].mxu0
        %v1136 = vadd.f32 %v1052, %v1135
        %v1137 = vpop.f32.mrb[0].mxu0
        %1138 = vdwg.mxu0
        %1139 = vmatprep.subr.mxu0 0.0
        %1140 = vmatpush1.msra.mxu0 %v773
        %1141 = vmatprep.subr.mxu0 0.0
        %1142 = vmatpush1.msra.mxu0 %v774
        %1143 = vmatprep.subr.mxu0 0.0
        %1144 = vmatpush1.msra.mxu0 %v775
        %1145 = vmatprep.subr.mxu0 0.0
        %1146 = vmatpush1.msra.mxu0 %v776
        %1147 = vmatprep.subr.mxu0 0.0
        %1148 = vmatpush1.msra.mxu0 0.0
        %1149 = vmatprep.subr.mxu0 0.0
        %1150 = vmatpush1.msra.mxu0 0.0
        %1151 = vmatprep.subr.mxu0 0.0
        %1152 = vmatpush1.msra.mxu0 0.0
        %1153 = vmatprep.subr.mxu0 0.0
        %1154 = vmatpush1.msra.mxu0 0.0
        %1155 = vmatprep.subr.mxu0 0.0
        %1156 = vmatpush1.msra.mxu0 0.0
        %1157 = vmatprep.subr.mxu0 0.0
        %1158 = vmatpush1.msra.mxu0 0.0
        %1159 = vmatprep.subr.mxu0 0.0
        %1160 = vmatpush1.msra.mxu0 0.0
        %1161 = vmatprep.subr.mxu0 0.0
        %1162 = vmatpush1.msra.mxu0 0.0
        %1163 = vmatprep.subr.mxu0 0.0
        %1164 = vmatpush1.msra.mxu0 0.0
        %1165 = vmatprep.subr.mxu0 0.0
        %1166 = vmatpush1.msra.mxu0 0.0
        %1167 = vmatprep.subr.mxu0 0.0
        %1168 = vmatpush1.msra.mxu0 0.0
        %1169 = vmatprep.subr.mxu0 0.0
        %1170 = vmatpush1.msra.mxu0 0.0
        %1171 = vmatprep.subr.mxu0 0.0
        %1172 = vmatpush1.msra.mxu0 0.0
        %1173 = vmatprep.subr.mxu0 0.0
        %1174 = vmatpush1.msra.mxu0 0.0
        %1175 = vmatprep.subr.mxu0 0.0
        %1176 = vmatpush1.msra.mxu0 0.0
        %1177 = vmatprep.subr.mxu0 0.0
        %1178 = vmatpush1.msra.mxu0 0.0
        %1179 = vmatprep.subr.mxu0 0.0
        %1180 = vmatpush1.msra.mxu0 0.0
        %1181 = vmatprep.subr.mxu0 0.0
        %1182 = vmatpush1.msra.mxu0 0.0
        %1183 = vmatprep.subr.mxu0 0.0
        %1184 = vmatpush1.msra.mxu0 0.0
        %1185 = vmatprep.subr.mxu0 0.0
        %1186 = vmatpush1.msra.mxu0 0.0
        %1187 = vmatprep.subr.mxu0 0.0
        %1188 = vmatpush1.msra.mxu0 0.0
        %1189 = vmatprep.subr.mxu0 0.0
        %1190 = vmatpush1.msra.mxu0 0.0
        %1191 = vmatprep.subr.mxu0 0.0
        %1192 = vmatpush1.msra.mxu0 0.0
        %1193 = vmatprep.subr.mxu0 0.0
        %1194 = vmatpush1.msra.mxu0 0.0
        %1195 = vmatprep.subr.mxu0 0.0
        %1196 = vmatpush1.msra.mxu0 0.0
        %1197 = vmatprep.subr.mxu0 0.0
        %1198 = vmatpush1.msra.mxu0 0.0
        %1199 = vmatprep.subr.mxu0 0.0
        %1200 = vmatpush1.msra.mxu0 0.0
        %1201 = vmatprep.subr.mxu0 0.0
        %1202 = vmatpush1.msra.mxu0 0.0
        %1203 = vmatprep.mubr.f32.mxu0 0.0
        %1204 = vmatmul.mubr.f32.gmra.mrb[0].mxu0 %v786
        %v1205 = vpop.f32.mrb[0].mxu0
        %v1206 = vadd.f32 %v1052, %v1205
        %v1207 = vpop.f32.mrb[0].mxu0
        %1208 = vmatprep.mubr.f32.mxu0 0.0
        %1209 = vmatmul.mubr.f32.gmra.mrb[0].mxu0 %v789
        %v1210 = vpop.f32.mrb[0].mxu0
        %v1211 = vadd.f32 %v1052, %v1210
        %v1212 = vpop.f32.mrb[0].mxu0
        %1213 = vdwg.mxu0
        %1214 = vmatprep.subr.mxu0 0.0
        %1215 = vmatpush1.xpose.msra.mxu0 %v954
        %1216 = vmatprep.subr.mxu0 0.0
        %1217 = vmatpush1.xpose.msra.mxu0 %v959
        %1218 = vmatprep.subr.mxu0 0.0
        %1219 = vmatpush1.xpose.msra.mxu0 0.0
        %1220 = vmatprep.subr.mxu0 0.0
        %1221 = vmatpush1.xpose.msra.mxu0 0.0
        %1222 = vmatprep.subr.mxu0 0.0
        %1223 = vmatpush1.xpose.msra.mxu0 0.0
        %1224 = vmatprep.subr.mxu0 0.0
        %1225 = vmatpush1.xpose.msra.mxu0 0.0
        %1226 = vmatprep.subr.mxu0 0.0
        %1227 = vmatpush1.xpose.msra.mxu0 0.0
        %1228 = vmatprep.subr.mxu0 0.0
        %1229 = vmatpush1.xpose.msra.mxu0 0.0
        %1230 = vmatprep.subr.mxu0 0.0
        %1231 = vmatpush1.xpose.msra.mxu0 0.0
        %1232 = vmatprep.subr.mxu0 0.0
        %1233 = vmatpush1.xpose.msra.mxu0 0.0
        %1234 = vmatprep.subr.mxu0 0.0
        %1235 = vmatpush1.xpose.msra.mxu0 0.0
        %1236 = vmatprep.subr.mxu0 0.0
        %1237 = vmatpush1.xpose.msra.mxu0 0.0
        %1238 = vmatprep.subr.mxu0 0.0
        %1239 = vmatpush1.xpose.msra.mxu0 0.0
        %1240 = vmatprep.subr.mxu0 0.0
        %1241 = vmatpush1.xpose.msra.mxu0 0.0
        %1242 = vmatprep.subr.mxu0 0.0
        %1243 = vmatpush1.xpose.msra.mxu0 0.0
        %1244 = vmatprep.subr.mxu0 0.0
        %1245 = vmatpush1.xpose.msra.mxu0 0.0
        %1246 = vmatprep.subr.mxu0 0.0
        %1247 = vmatpush1.xpose.msra.mxu0 0.0
        %1248 = vmatprep.subr.mxu0 0.0
        %1249 = vmatpush1.xpose.msra.mxu0 0.0
        %1250 = vmatprep.subr.mxu0 0.0
        %1251 = vmatpush1.xpose.msra.mxu0 0.0
        %1252 = vmatprep.subr.mxu0 0.0
        %1253 = vmatpush1.xpose.msra.mxu0 0.0
        %1254 = vmatprep.subr.mxu0 0.0
        %1255 = vmatpush1.xpose.msra.mxu0 0.0
        %1256 = vmatprep.subr.mxu0 0.0
        %1257 = vmatpush1.xpose.msra.mxu0 0.0
        %1258 = vmatprep.subr.mxu0 0.0
        %1259 = vmatpush1.xpose.msra.mxu0 0.0
        %1260 = vmatprep.subr.mxu0 0.0
        %1261 = vmatpush1.xpose.msra.mxu0 0.0
        %1262 = vmatprep.subr.mxu0 0.0
        %1263 = vmatpush1.xpose.msra.mxu0 0.0
        %1264 = vmatprep.subr.mxu0 0.0
        %1265 = vmatpush1.xpose.msra.mxu0 0.0
        %1266 = vmatprep.subr.mxu0 0.0
        %1267 = vmatpush1.xpose.msra.mxu0 0.0
        %1268 = vmatprep.subr.mxu0 0.0
        %1269 = vmatpush1.xpose.msra.mxu0 0.0
        %1270 = vmatprep.subr.mxu0 0.0
        %1271 = vmatpush1.xpose.msra.mxu0 0.0
        %1272 = vmatprep.subr.mxu0 0.0
        %1273 = vmatpush1.xpose.msra.mxu0 0.0
        %1274 = vmatprep.subr.mxu0 0.0
        %1275 = vmatpush1.xpose.msra.mxu0 0.0
        %1276 = vmatprep.subr.mxu0 0.0
        %1277 = vmatpush1.xpose.msra.mxu0 0.0
        %1278 = vmatprep.mubr.f32.mxu0 0.0
        %1279 = vmatmul.mubr.f32.gmra.mrb[0].mxu0 %v866
        %v1280 = vpop.f32.mrb[0].mxu0
        %v1281 = vadd.f32 0.0, %v1280
        %v1282 = vpop.f32.mrb[0].mxu0
        %1283 = vdwg.mxu0
        %1284 = vmatprep.subr.mxu0 0.0
        %1285 = vmatpush1.xpose.msra.mxu0 %v964
        %1286 = vmatprep.subr.mxu0 0.0
        %1287 = vmatpush1.xpose.msra.mxu0 %v969
        %1288 = vmatprep.subr.mxu0 0.0
        %1289 = vmatpush1.xpose.msra.mxu0 0.0
        %1290 = vmatprep.subr.mxu0 0.0
        %1291 = vmatpush1.xpose.msra.mxu0 0.0
        %1292 = vmatprep.subr.mxu0 0.0
        %1293 = vmatpush1.xpose.msra.mxu0 0.0
        %1294 = vmatprep.subr.mxu0 0.0
        %1295 = vmatpush1.xpose.msra.mxu0 0.0
        %1296 = vmatprep.subr.mxu0 0.0
        %1297 = vmatpush1.xpose.msra.mxu0 0.0
        %1298 = vmatprep.subr.mxu0 0.0
        %1299 = vmatpush1.xpose.msra.mxu0 0.0
        %1300 = vmatprep.subr.mxu0 0.0
        %1301 = vmatpush1.xpose.msra.mxu0 0.0
        %1302 = vmatprep.subr.mxu0 0.0
        %1303 = vmatpush1.xpose.msra.mxu0 0.0
        %1304 = vmatprep.subr.mxu0 0.0
        %1305 = vmatpush1.xpose.msra.mxu0 0.0
        %1306 = vmatprep.subr.mxu0 0.0
        %1307 = vmatpush1.xpose.msra.mxu0 0.0
        %1308 = vmatprep.subr.mxu0 0.0
        %1309 = vmatpush1.xpose.msra.mxu0 0.0
        %1310 = vmatprep.subr.mxu0 0.0
        %1311 = vmatpush1.xpose.msra.mxu0 0.0
        %1312 = vmatprep.subr.mxu0 0.0
        %1313 = vmatpush1.xpose.msra.mxu0 0.0
        %1314 = vmatprep.subr.mxu0 0.0
        %1315 = vmatpush1.xpose.msra.mxu0 0.0
        %1316 = vmatprep.subr.mxu0 0.0
        %1317 = vmatpush1.xpose.msra.mxu0 0.0
        %1318 = vmatprep.subr.mxu0 0.0
        %1319 = vmatpush1.xpose.msra.mxu0 0.0
        %1320 = vmatprep.subr.mxu0 0.0
        %1321 = vmatpush1.xpose.msra.mxu0 0.0
        %1322 = vmatprep.subr.mxu0 0.0
        %1323 = vmatpush1.xpose.msra.mxu0 0.0
        %1324 = vmatprep.subr.mxu0 0.0
        %1325 = vmatpush1.xpose.msra.mxu0 0.0
        %1326 = vmatprep.subr.mxu0 0.0
        %1327 = vmatpush1.xpose.msra.mxu0 0.0
        %1328 = vmatprep.subr.mxu0 0.0
        %1329 = vmatpush1.xpose.msra.mxu0 0.0
        %1330 = vmatprep.subr.mxu0 0.0
        %1331 = vmatpush1.xpose.msra.mxu0 0.0
        %1332 = vmatprep.subr.mxu0 0.0
        %1333 = vmatpush1.xpose.msra.mxu0 0.0
        %1334 = vmatprep.subr.mxu0 0.0
        %1335 = vmatpush1.xpose.msra.mxu0 0.0
        %1336 = vmatprep.subr.mxu0 0.0
        %1337 = vmatpush1.xpose.msra.mxu0 0.0
        %1338 = vmatprep.subr.mxu0 0.0
        %1339 = vmatpush1.xpose.msra.mxu0 0.0
        %1340 = vmatprep.subr.mxu0 0.0
        %1341 = vmatpush1.xpose.msra.mxu0 0.0
        %1342 = vmatprep.subr.mxu0 0.0
        %1343 = vmatpush1.xpose.msra.mxu0 0.0
        %1344 = vmatprep.subr.mxu0 0.0
        %1345 = vmatpush1.xpose.msra.mxu0 0.0
        %1346 = vmatprep.subr.mxu0 0.0
        %1347 = vmatpush1.xpose.msra.mxu0 0.0
        %1348 = vmatprep.mubr.f32.mxu0 0.0
        %1349 = vmatmul.mubr.f32.gmra.mrb[0].mxu0 %v867
        %v1350 = vpop.f32.mrb[0].mxu0
        %v1351 = vadd.f32 0.0, %v1350
        %v1352 = vpop.f32.mrb[0].mxu0
        %1353 = vdwg.mxu0
        %1354 = vmatprep.subr.mxu0 0.0
        %1355 = vmatpush1.xpose.msra.mxu0 %v1039
        %1356 = vmatprep.subr.mxu0 0.0
        %1357 = vmatpush1.xpose.msra.mxu0 0.0
        %1358 = vmatprep.subr.mxu0 0.0
        %1359 = vmatpush1.xpose.msra.mxu0 0.0
        %1360 = vmatprep.subr.mxu0 0.0
        %1361 = vmatpush1.xpose.msra.mxu0 0.0
        %1362 = vmatprep.subr.mxu0 0.0
        %1363 = vmatpush1.xpose.msra.mxu0 0.0
        %1364 = vmatprep.subr.mxu0 0.0
        %1365 = vmatpush1.xpose.msra.mxu0 0.0
        %1366 = vmatprep.subr.mxu0 0.0
        %1367 = vmatpush1.xpose.msra.mxu0 0.0
        %1368 = vmatprep.subr.mxu0 0.0
        %1369 = vmatpush1.xpose.msra.mxu0 0.0
        %1370 = vmatprep.subr.mxu0 0.0
        %1371 = vmatpush1.xpose.msra.mxu0 0.0
        %1372 = vmatprep.subr.mxu0 0.0
        %1373 = vmatpush1.xpose.msra.mxu0 0.0
        %1374 = vmatprep.subr.mxu0 0.0
        %1375 = vmatpush1.xpose.msra.mxu0 0.0
        %1376 = vmatprep.subr.mxu0 0.0
        %1377 = vmatpush1.xpose.msra.mxu0 0.0
        %1378 = vmatprep.subr.mxu0 0.0
        %1379 = vmatpush1.xpose.msra.mxu0 0.0
        %1380 = vmatprep.subr.mxu0 0.0
        %1381 = vmatpush1.xpose.msra.mxu0 0.0
        %1382 = vmatprep.subr.mxu0 0.0
        %1383 = vmatpush1.xpose.msra.mxu0 0.0
        %1384 = vmatprep.subr.mxu0 0.0
        %1385 = vmatpush1.xpose.msra.mxu0 0.0
        %1386 = vmatprep.subr.mxu0 0.0
        %1387 = vmatpush1.xpose.msra.mxu0 0.0
        %1388 = vmatprep.subr.mxu0 0.0
        %1389 = vmatpush1.xpose.msra.mxu0 0.0
        %1390 = vmatprep.subr.mxu0 0.0
        %1391 = vmatpush1.xpose.msra.mxu0 0.0
        %1392 = vmatprep.subr.mxu0 0.0
        %1393 = vmatpush1.xpose.msra.mxu0 0.0
        %1394 = vmatprep.subr.mxu0 0.0
        %1395 = vmatpush1.xpose.msra.mxu0 0.0
        %1396 = vmatprep.subr.mxu0 0.0
        %1397 = vmatpush1.xpose.msra.mxu0 0.0
        %1398 = vmatprep.subr.mxu0 0.0
        %1399 = vmatpush1.xpose.msra.mxu0 0.0
        %1400 = vmatprep.subr.mxu0 0.0
        %1401 = vmatpush1.xpose.msra.mxu0 0.0
        %1402 = vmatprep.subr.mxu0 0.0
        %1403 = vmatpush1.xpose.msra.mxu0 0.0
        %1404 = vmatprep.subr.mxu0 0.0
        %1405 = vmatpush1.xpose.msra.mxu0 0.0
        %1406 = vmatprep.subr.mxu0 0.0
        %1407 = vmatpush1.xpose.msra.mxu0 0.0
        %1408 = vmatprep.subr.mxu0 0.0
        %1409 = vmatpush1.xpose.msra.mxu0 0.0
        %1410 = vmatprep.subr.mxu0 0.0
        %1411 = vmatpush1.xpose.msra.mxu0 0.0
        %1412 = vmatprep.subr.mxu0 0.0
        %1413 = vmatpush1.xpose.msra.mxu0 0.0
        %1414 = vmatprep.subr.mxu0 0.0
        %1415 = vmatpush1.xpose.msra.mxu0 0.0
        %1416 = vmatprep.subr.mxu0 0.0
        %1417 = vmatpush1.xpose.msra.mxu0 0.0
        %1418 = vmatprep.mubr.f32.mxu0 0.0
        %1419 = vmatmul.mubr.f32.gmra.mrb[0].mxu0 %v866
        %v1420 = vpop.f32.mrb[0].mxu0
        %v1421 = vadd.f32 0.0, %v1420
        %v1422 = vpop.f32.mrb[0].mxu0
        %1423 = vdwg.mxu0
        %1424 = vmatprep.subr.mxu0 0.0
        %1425 = vmatpush1.xpose.msra.mxu0 %v1044
        %1426 = vmatprep.subr.mxu0 0.0
        %1427 = vmatpush1.xpose.msra.mxu0 0.0
        %1428 = vmatprep.subr.mxu0 0.0
        %1429 = vmatpush1.xpose.msra.mxu0 0.0
        %1430 = vmatprep.subr.mxu0 0.0
        %1431 = vmatpush1.xpose.msra.mxu0 0.0
        %1432 = vmatprep.subr.mxu0 0.0
        %1433 = vmatpush1.xpose.msra.mxu0 0.0
        %1434 = vmatprep.subr.mxu0 0.0
        %1435 = vmatpush1.xpose.msra.mxu0 0.0
        %1436 = vmatprep.subr.mxu0 0.0
        %1437 = vmatpush1.xpose.msra.mxu0 0.0
        %1438 = vmatprep.subr.mxu0 0.0
        %1439 = vmatpush1.xpose.msra.mxu0 0.0
        %1440 = vmatprep.subr.mxu0 0.0
        %1441 = vmatpush1.xpose.msra.mxu0 0.0
        %1442 = vmatprep.subr.mxu0 0.0
        %1443 = vmatpush1.xpose.msra.mxu0 0.0
        %1444 = vmatprep.subr.mxu0 0.0
        %1445 = vmatpush1.xpose.msra.mxu0 0.0
        %1446 = vmatprep.subr.mxu0 0.0
        %1447 = vmatpush1.xpose.msra.mxu0 0.0
        %1448 = vmatprep.subr.mxu0 0.0
        %1449 = vmatpush1.xpose.msra.mxu0 0.0
        %1450 = vmatprep.subr.mxu0 0.0
        %1451 = vmatpush1.xpose.msra.mxu0 0.0
        %1452 = vmatprep.subr.mxu0 0.0
        %1453 = vmatpush1.xpose.msra.mxu0 0.0
        %1454 = vmatprep.subr.mxu0 0.0
        %1455 = vmatpush1.xpose.msra.mxu0 0.0
        %1456 = vmatprep.subr.mxu0 0.0
        %1457 = vmatpush1.xpose.msra.mxu0 0.0
        %1458 = vmatprep.subr.mxu0 0.0
        %1459 = vmatpush1.xpose.msra.mxu0 0.0
        %1460 = vmatprep.subr.mxu0 0.0
        %1461 = vmatpush1.xpose.msra.mxu0 0.0
        %1462 = vmatprep.subr.mxu0 0.0
        %1463 = vmatpush1.xpose.msra.mxu0 0.0
        %1464 = vmatprep.subr.mxu0 0.0
        %1465 = vmatpush1.xpose.msra.mxu0 0.0
        %1466 = vmatprep.subr.mxu0 0.0
        %1467 = vmatpush1.xpose.msra.mxu0 0.0
        %1468 = vmatprep.subr.mxu0 0.0
        %1469 = vmatpush1.xpose.msra.mxu0 0.0
        %1470 = vmatprep.subr.mxu0 0.0
        %1471 = vmatpush1.xpose.msra.mxu0 0.0
        %1472 = vmatprep.subr.mxu0 0.0
        %1473 = vmatpush1.xpose.msra.mxu0 0.0
        %1474 = vmatprep.subr.mxu0 0.0
        %1475 = vmatpush1.xpose.msra.mxu0 0.0
        %1476 = vmatprep.subr.mxu0 0.0
        %1477 = vmatpush1.xpose.msra.mxu0 0.0
        %1478 = vmatprep.subr.mxu0 0.0
        %1479 = vmatpush1.xpose.msra.mxu0 0.0
        %1480 = vmatprep.subr.mxu0 0.0
        %1481 = vmatpush1.xpose.msra.mxu0 0.0
        %1482 = vmatprep.subr.mxu0 0.0
        %1483 = vmatpush1.xpose.msra.mxu0 0.0
        %1484 = vmatprep.subr.mxu0 0.0
        %1485 = vmatpush1.xpose.msra.mxu0 0.0
        %1486 = vmatprep.subr.mxu0 0.0
        %1487 = vmatpush1.xpose.msra.mxu0 0.0
        %1488 = vmatprep.mubr.f32.mxu0 0.0
        %1489 = vmatmul.mubr.f32.gmra.mrb[0].mxu0 %v867
        %v1490 = vpop.f32.mrb[0].mxu0
        %v1491 = vadd.f32 0.0, %v1490
        %v1492 = vpop.f32.mrb[0].mxu0
        %1493 = vdwg.mxu0
        %vm1494 = vcmask 130048
        %v1495 = vsel %vm1494, %v1281, -inf
        %1496 = vmax.xlane.f32.xlu0 %v1495
        %v1497 = vpop.xlane.xlu0 %1496
        %v1498 = vsel %vm1494, %v1351, -inf
        %1499 = vmax.xlane.f32.xlu0 %v1498
        %v1500 = vpop.xlane.xlu0 %1499
        %vm1501 = vcmask 64512
        %v1502 = vsel %vm1501, %v1421, -inf
        %1503 = vmax.xlane.f32.xlu0 %v1502
        %v1504 = vpop.xlane.xlu0 %1503
        %v1505 = vsel %vm1501, %v1491, -inf
        %1506 = vmax.xlane.f32.xlu0 %v1505
        %v1507 = vpop.xlane.xlu0 %1506
        %v1508 = vmax.f32 %v1497, %v1504
        %v1509 = vmax.f32 %v1500, %v1507
        %v1510 = vsub.f32 %v1281, %v1508
        %v1511 = vsub.f32 %v1351, %v1509
        %v1512 = vmul.f32 %v1510, 1.442695
        %v1513 = vpow.pop %v1512
        %v1514 = vmul.f32 %v1511, 1.442695
        %v1515 = vpow.pop %v1514
        %v1516 = vsub.f32 %v1421, %v1508
        %v1517 = vsub.f32 %v1491, %v1509
        %v1518 = vmul.f32 %v1516, 1.442695
        %v1519 = vpow.pop %v1518
        %v1520 = vmul.f32 %v1517, 1.442695
        %v1521 = vpow.pop %v1520
        %v1522 = vsel %vm1494, %v1513, 0.0
        %1523 = vadd.xlane.f32.xlu0 %v1522
        %v1524 = vpop.xlane.xlu0 %1523
        %v1525 = vsel %vm1494, %v1515, 0.0
        %1526 = vadd.xlane.f32.xlu0 %v1525
        %v1527 = vpop.xlane.xlu0 %1526
        %v1528 = vsel %vm1501, %v1519, 0.0
        %1529 = vadd.xlane.f32.xlu0 %v1528
        %v1530 = vpop.xlane.xlu0 %1529
        %v1531 = vsel %vm1501, %v1521, 0.0
        %1532 = vadd.xlane.f32.xlu0 %v1531
        %v1533 = vpop.xlane.xlu0 %1532
        %v1534 = vadd.f32 %v1524, %v1530
        %v1535 = vadd.f32 %v1527, %v1533
        %v1536 = vrcp.pop %v1534
        %v1537 = vrcp.pop %v1535
        %v1539 = vsel %vm1501, %v1519, 0
        %1541 = vmatprep.subr.mxu0 0.0
        %1542 = vmatpush1.msra.mxu0 %v1206
        %1543 = vmatprep.subr.mxu0 0.0
        %1544 = vmatpush1.msra.mxu0 0.0
        %1545 = vmatprep.subr.mxu0 0.0
        %1546 = vmatpush1.msra.mxu0 0.0
        %1547 = vmatprep.subr.mxu0 0.0
        %1548 = vmatpush1.msra.mxu0 0.0
        %1549 = vmatprep.subr.mxu0 0.0
        %1550 = vmatpush1.msra.mxu0 0.0
        %1551 = vmatprep.subr.mxu0 0.0
        %1552 = vmatpush1.msra.mxu0 0.0
        %1553 = vmatprep.subr.mxu0 0.0
        %1554 = vmatpush1.msra.mxu0 0.0
        %1555 = vmatprep.subr.mxu0 0.0
        %1556 = vmatpush1.msra.mxu0 0.0
        %1557 = vmatprep.subr.mxu0 0.0
        %1558 = vmatpush1.msra.mxu0 0.0
        %1559 = vmatprep.subr.mxu0 0.0
        %1560 = vmatpush1.msra.mxu0 0.0
        %1561 = vmatprep.subr.mxu0 0.0
        %1562 = vmatpush1.msra.mxu0 0.0
        %1563 = vmatprep.subr.mxu0 0.0
        %1564 = vmatpush1.msra.mxu0 0.0
        %1565 = vmatprep.subr.mxu0 0.0
        %1566 = vmatpush1.msra.mxu0 0.0
        %1567 = vmatprep.subr.mxu0 0.0
        %1568 = vmatpush1.msra.mxu0 0.0
        %1569 = vmatprep.subr.mxu0 0.0
        %1570 = vmatpush1.msra.mxu0 0.0
        %1571 = vmatprep.subr.mxu0 0.0
        %1572 = vmatpush1.msra.mxu0 0.0
        %1573 = vmatprep.subr.mxu0 0.0
        %1574 = vmatpush1.msra.mxu0 0.0
        %1575 = vmatprep.subr.mxu0 0.0
        %1576 = vmatpush1.msra.mxu0 0.0
        %1577 = vmatprep.subr.mxu0 0.0
        %1578 = vmatpush1.msra.mxu0 0.0
        %1579 = vmatprep.subr.mxu0 0.0
        %1580 = vmatpush1.msra.mxu0 0.0
        %1581 = vmatprep.subr.mxu0 0.0
        %1582 = vmatpush1.msra.mxu0 0.0
        %1583 = vmatprep.subr.mxu0 0.0
        %1584 = vmatpush1.msra.mxu0 0.0
        %1585 = vmatprep.subr.mxu0 0.0
        %1586 = vmatpush1.msra.mxu0 0.0
        %1587 = vmatprep.subr.mxu0 0.0
        %1588 = vmatpush1.msra.mxu0 0.0
        %1589 = vmatprep.subr.mxu0 0.0
        %1590 = vmatpush1.msra.mxu0 0.0
        %1591 = vmatprep.subr.mxu0 0.0
        %1592 = vmatpush1.msra.mxu0 0.0
        %1593 = vmatprep.subr.mxu0 0.0
        %1594 = vmatpush1.msra.mxu0 0.0
        %1595 = vmatprep.subr.mxu0 0.0
        %1596 = vmatpush1.msra.mxu0 0.0
        %1597 = vmatprep.subr.mxu0 0.0
        %1598 = vmatpush1.msra.mxu0 0.0
        %1599 = vmatprep.subr.mxu0 0.0
        %1600 = vmatpush1.msra.mxu0 0.0
        %1601 = vmatprep.subr.mxu0 0.0
        %1602 = vmatpush1.msra.mxu0 0.0
        %1603 = vmatprep.subr.mxu0 0.0
        %1604 = vmatpush1.msra.mxu0 0.0
        %1605 = vmatprep.mubr.f32.mxu0 0.0
        %1606 = vmatmul.mubr.f32.gmra.mrb[0].mxu0 %v1539
        %v1607 = vpop.f32.mrb[0].mxu0
        %v1608 = vadd.f32 0.0, %v1607
        %v1609 = vpop.f32.mrb[0].mxu0
        %1610 = vdwg.mxu0
        %v1612 = vsel %vm1501, %v1521, 0
        %1614 = vmatprep.subr.mxu0 0.0
        %1615 = vmatpush1.msra.mxu0 %v1211
        %1616 = vmatprep.subr.mxu0 0.0
        %1617 = vmatpush1.msra.mxu0 0.0
        %1618 = vmatprep.subr.mxu0 0.0
        %1619 = vmatpush1.msra.mxu0 0.0
        %1620 = vmatprep.subr.mxu0 0.0
        %1621 = vmatpush1.msra.mxu0 0.0
        %1622 = vmatprep.subr.mxu0 0.0
        %1623 = vmatpush1.msra.mxu0 0.0
        %1624 = vmatprep.subr.mxu0 0.0
        %1625 = vmatpush1.msra.mxu0 0.0
        %1626 = vmatprep.subr.mxu0 0.0
        %1627 = vmatpush1.msra.mxu0 0.0
        %1628 = vmatprep.subr.mxu0 0.0
        %1629 = vmatpush1.msra.mxu0 0.0
        %1630 = vmatprep.subr.mxu0 0.0
        %1631 = vmatpush1.msra.mxu0 0.0
        %1632 = vmatprep.subr.mxu0 0.0
        %1633 = vmatpush1.msra.mxu0 0.0
        %1634 = vmatprep.subr.mxu0 0.0
        %1635 = vmatpush1.msra.mxu0 0.0
        %1636 = vmatprep.subr.mxu0 0.0
        %1637 = vmatpush1.msra.mxu0 0.0
        %1638 = vmatprep.subr.mxu0 0.0
        %1639 = vmatpush1.msra.mxu0 0.0
        %1640 = vmatprep.subr.mxu0 0.0
        %1641 = vmatpush1.msra.mxu0 0.0
        %1642 = vmatprep.subr.mxu0 0.0
        %1643 = vmatpush1.msra.mxu0 0.0
        %1644 = vmatprep.subr.mxu0 0.0
        %1645 = vmatpush1.msra.mxu0 0.0
        %1646 = vmatprep.subr.mxu0 0.0
        %1647 = vmatpush1.msra.mxu0 0.0
        %1648 = vmatprep.subr.mxu0 0.0
        %1649 = vmatpush1.msra.mxu0 0.0
        %1650 = vmatprep.subr.mxu0 0.0
        %1651 = vmatpush1.msra.mxu0 0.0
        %1652 = vmatprep.subr.mxu0 0.0
        %1653 = vmatpush1.msra.mxu0 0.0
        %1654 = vmatprep.subr.mxu0 0.0
        %1655 = vmatpush1.msra.mxu0 0.0
        %1656 = vmatprep.subr.mxu0 0.0
        %1657 = vmatpush1.msra.mxu0 0.0
        %1658 = vmatprep.subr.mxu0 0.0
        %1659 = vmatpush1.msra.mxu0 0.0
        %1660 = vmatprep.subr.mxu0 0.0
        %1661 = vmatpush1.msra.mxu0 0.0
        %1662 = vmatprep.subr.mxu0 0.0
        %1663 = vmatpush1.msra.mxu0 0.0
        %1664 = vmatprep.subr.mxu0 0.0
        %1665 = vmatpush1.msra.mxu0 0.0
        %1666 = vmatprep.subr.mxu0 0.0
        %1667 = vmatpush1.msra.mxu0 0.0
        %1668 = vmatprep.subr.mxu0 0.0
        %1669 = vmatpush1.msra.mxu0 0.0
        %1670 = vmatprep.subr.mxu0 0.0
        %1671 = vmatpush1.msra.mxu0 0.0
        %1672 = vmatprep.subr.mxu0 0.0
        %1673 = vmatpush1.msra.mxu0 0.0
        %1674 = vmatprep.subr.mxu0 0.0
        %1675 = vmatpush1.msra.mxu0 0.0
        %1676 = vmatprep.subr.mxu0 0.0
        %1677 = vmatpush1.msra.mxu0 0.0
        %1678 = vmatprep.mubr.f32.mxu0 0.0
        %1679 = vmatmul.mubr.f32.gmra.mrb[0].mxu0 %v1612
        %v1680 = vpop.f32.mrb[0].mxu0
        %v1681 = vadd.f32 0.0, %v1680
        %v1682 = vpop.f32.mrb[0].mxu0
        %1683 = vdwg.mxu0
        %v1685 = vsel %vm1494, %v1513, 0
        %1687 = vmatprep.subr.mxu0 0.0
        %1688 = vmatpush1.msra.mxu0 %v1121
        %1689 = vmatprep.subr.mxu0 0.0
        %1690 = vmatpush1.msra.mxu0 %v1126
        %1691 = vmatprep.subr.mxu0 0.0
        %1692 = vmatpush1.msra.mxu0 0.0
        %1693 = vmatprep.subr.mxu0 0.0
        %1694 = vmatpush1.msra.mxu0 0.0
        %1695 = vmatprep.subr.mxu0 0.0
        %1696 = vmatpush1.msra.mxu0 0.0
        %1697 = vmatprep.subr.mxu0 0.0
        %1698 = vmatpush1.msra.mxu0 0.0
        %1699 = vmatprep.subr.mxu0 0.0
        %1700 = vmatpush1.msra.mxu0 0.0
        %1701 = vmatprep.subr.mxu0 0.0
        %1702 = vmatpush1.msra.mxu0 0.0
        %1703 = vmatprep.subr.mxu0 0.0
        %1704 = vmatpush1.msra.mxu0 0.0
        %1705 = vmatprep.subr.mxu0 0.0
        %1706 = vmatpush1.msra.mxu0 0.0
        %1707 = vmatprep.subr.mxu0 0.0
        %1708 = vmatpush1.msra.mxu0 0.0
        %1709 = vmatprep.subr.mxu0 0.0
        %1710 = vmatpush1.msra.mxu0 0.0
        %1711 = vmatprep.subr.mxu0 0.0
        %1712 = vmatpush1.msra.mxu0 0.0
        %1713 = vmatprep.subr.mxu0 0.0
        %1714 = vmatpush1.msra.mxu0 0.0
        %1715 = vmatprep.subr.mxu0 0.0
        %1716 = vmatpush1.msra.mxu0 0.0
        %1717 = vmatprep.subr.mxu0 0.0
        %1718 = vmatpush1.msra.mxu0 0.0
        %1719 = vmatprep.subr.mxu0 0.0
        %1720 = vmatpush1.msra.mxu0 0.0
        %1721 = vmatprep.subr.mxu0 0.0
        %1722 = vmatpush1.msra.mxu0 0.0
        %1723 = vmatprep.subr.mxu0 0.0
        %1724 = vmatpush1.msra.mxu0 0.0
        %1725 = vmatprep.subr.mxu0 0.0
        %1726 = vmatpush1.msra.mxu0 0.0
        %1727 = vmatprep.subr.mxu0 0.0
        %1728 = vmatpush1.msra.mxu0 0.0
        %1729 = vmatprep.subr.mxu0 0.0
        %1730 = vmatpush1.msra.mxu0 0.0
        %1731 = vmatprep.subr.mxu0 0.0
        %1732 = vmatpush1.msra.mxu0 0.0
        %1733 = vmatprep.subr.mxu0 0.0
        %1734 = vmatpush1.msra.mxu0 0.0
        %1735 = vmatprep.subr.mxu0 0.0
        %1736 = vmatpush1.msra.mxu0 0.0
        %1737 = vmatprep.subr.mxu0 0.0
        %1738 = vmatpush1.msra.mxu0 0.0
        %1739 = vmatprep.subr.mxu0 0.0
        %1740 = vmatpush1.msra.mxu0 0.0
        %1741 = vmatprep.subr.mxu0 0.0
        %1742 = vmatpush1.msra.mxu0 0.0
        %1743 = vmatprep.subr.mxu0 0.0
        %1744 = vmatpush1.msra.mxu0 0.0
        %1745 = vmatprep.subr.mxu0 0.0
        %1746 = vmatpush1.msra.mxu0 0.0
        %1747 = vmatprep.subr.mxu0 0.0
        %1748 = vmatpush1.msra.mxu0 0.0
        %1749 = vmatprep.subr.mxu0 0.0
        %1750 = vmatpush1.msra.mxu0 0.0
        %1751 = vmatprep.mubr.f32.mxu0 0.0
        %1752 = vmatmul.mubr.f32.gmra.mrb[0].mxu0 %v1685
        %v1753 = vpop.f32.mrb[0].mxu0
        %v1754 = vadd.f32 %v1608, %v1753
        %v1755 = vpop.f32.mrb[0].mxu0
        %1756 = vdwg.mxu0
        %v1758 = vsel %vm1494, %v1515, 0
        %1760 = vmatprep.subr.mxu0 0.0
        %1761 = vmatpush1.msra.mxu0 %v1131
        %1762 = vmatprep.subr.mxu0 0.0
        %1763 = vmatpush1.msra.mxu0 %v1136
        %1764 = vmatprep.subr.mxu0 0.0
        %1765 = vmatpush1.msra.mxu0 0.0
        %1766 = vmatprep.subr.mxu0 0.0
        %1767 = vmatpush1.msra.mxu0 0.0
        %1768 = vmatprep.subr.mxu0 0.0
        %1769 = vmatpush1.msra.mxu0 0.0
        %1770 = vmatprep.subr.mxu0 0.0
        %1771 = vmatpush1.msra.mxu0 0.0
        %1772 = vmatprep.subr.mxu0 0.0
        %1773 = vmatpush1.msra.mxu0 0.0
        %1774 = vmatprep.subr.mxu0 0.0
        %1775 = vmatpush1.msra.mxu0 0.0
        %1776 = vmatprep.subr.mxu0 0.0
        %1777 = vmatpush1.msra.mxu0 0.0
        %1778 = vmatprep.subr.mxu0 0.0
        %1779 = vmatpush1.msra.mxu0 0.0
        %1780 = vmatprep.subr.mxu0 0.0
        %1781 = vmatpush1.msra.mxu0 0.0
        %1782 = vmatprep.subr.mxu0 0.0
        %1783 = vmatpush1.msra.mxu0 0.0
        %1784 = vmatprep.subr.mxu0 0.0
        %1785 = vmatpush1.msra.mxu0 0.0
        %1786 = vmatprep.subr.mxu0 0.0
        %1787 = vmatpush1.msra.mxu0 0.0
        %1788 = vmatprep.subr.mxu0 0.0
        %1789 = vmatpush1.msra.mxu0 0.0
        %1790 = vmatprep.subr.mxu0 0.0
        %1791 = vmatpush1.msra.mxu0 0.0
        %1792 = vmatprep.subr.mxu0 0.0
        %1793 = vmatpush1.msra.mxu0 0.0
        %1794 = vmatprep.subr.mxu0 0.0
        %1795 = vmatpush1.msra.mxu0 0.0
        %1796 = vmatprep.subr.mxu0 0.0
        %1797 = vmatpush1.msra.mxu0 0.0
        %1798 = vmatprep.subr.mxu0 0.0
        %1799 = vmatpush1.msra.mxu0 0.0
        %1800 = vmatprep.subr.mxu0 0.0
        %1801 = vmatpush1.msra.mxu0 0.0
        %1802 = vmatprep.subr.mxu0 0.0
        %1803 = vmatpush1.msra.mxu0 0.0
        %1804 = vmatprep.subr.mxu0 0.0
        %1805 = vmatpush1.msra.mxu0 0.0
        %1806 = vmatprep.subr.mxu0 0.0
        %1807 = vmatpush1.msra.mxu0 0.0
        %1808 = vmatprep.subr.mxu0 0.0
        %1809 = vmatpush1.msra.mxu0 0.0
        %1810 = vmatprep.subr.mxu0 0.0
        %1811 = vmatpush1.msra.mxu0 0.0
        %1812 = vmatprep.subr.mxu0 0.0
        %1813 = vmatpush1.msra.mxu0 0.0
        %1814 = vmatprep.subr.mxu0 0.0
        %1815 = vmatpush1.msra.mxu0 0.0
        %1816 = vmatprep.subr.mxu0 0.0
        %1817 = vmatpush1.msra.mxu0 0.0
        %1818 = vmatprep.subr.mxu0 0.0
        %1819 = vmatpush1.msra.mxu0 0.0
        %1820 = vmatprep.subr.mxu0 0.0
        %1821 = vmatpush1.msra.mxu0 0.0
        %1822 = vmatprep.subr.mxu0 0.0
        %1823 = vmatpush1.msra.mxu0 0.0
        %1824 = vmatprep.mubr.f32.mxu0 0.0
        %1825 = vmatmul.mubr.f32.gmra.mrb[0].mxu0 %v1758
        %v1826 = vpop.f32.mrb[0].mxu0
        %v1827 = vadd.f32 %v1681, %v1826
        %v1828 = vpop.f32.mrb[0].mxu0
        %1829 = vdwg.mxu0
        %v1830 = vmul.f32 %v1754, %v1536
        %v1831 = vmul.f32 %v1827, %v1537
        %v1832 = vld [vmem:[#allocation4] sm:$0xff]
        %v1833 = vld [vmem:[#allocation4 + $0x8] sm:$0xff]
        %v1834 = vld [vmem:[%s619] sm:$0xff]
        %v1835 = vld [vmem:[%s619 + $0x8] sm:$0xff]
        %v1836 = vld [vmem:[%s619 + $0x10] sm:$0xff]
        %v1837 = vld [vmem:[%s619 + $0x18] sm:$0xff]
        %v1838 = vld [vmem:[%s619 + $0x20] sm:$0xff]
        %v1839 = vld [vmem:[%s619 + $0x28] sm:$0xff]
        %v1840 = vld [vmem:[%s619 + $0x30] sm:$0xff]
        %v1841 = vld [vmem:[%s619 + $0x38] sm:$0xff]
        %v1842 = vld [vmem:[%s619 + $0x40] sm:$0xff]
        %v1843 = vld [vmem:[%s619 + $0x48] sm:$0xff]
        %v1844 = vld [vmem:[%s619 + $0x50] sm:$0xff]
        %v1845 = vld [vmem:[%s619 + $0x58] sm:$0xff]
        %v1846 = vld [vmem:[%s619 + $0x60] sm:$0xff]
        %v1847 = vld [vmem:[%s619 + $0x68] sm:$0xff]
        %v1848 = vld [vmem:[%s619 + $0x70] sm:$0xff]
        %v1849 = vld [vmem:[%s619 + $0x78] sm:$0xff]
        %1850 = vmatprep.subr.mxu0 0.0
        %1851 = vmatpush1.msra.mxu0 %v1834
        %1852 = vmatprep.subr.mxu0 0.0
        %1853 = vmatpush1.msra.mxu0 %v1835
        %1854 = vmatprep.subr.mxu0 0.0
        %1855 = vmatpush1.msra.mxu0 %v1836
        %1856 = vmatprep.subr.mxu0 0.0
        %1857 = vmatpush1.msra.mxu0 %v1837
        %1858 = vmatprep.subr.mxu0 0.0
        %1859 = vmatpush1.msra.mxu0 %v1838
        %1860 = vmatprep.subr.mxu0 0.0
        %1861 = vmatpush1.msra.mxu0 %v1839
        %1862 = vmatprep.subr.mxu0 0.0
        %1863 = vmatpush1.msra.mxu0 %v1840
        %1864 = vmatprep.subr.mxu0 0.0
        %1865 = vmatpush1.msra.mxu0 %v1841
        %1866 = vmatprep.subr.mxu0 0.0
        %1867 = vmatpush1.msra.mxu0 %v1842
        %1868 = vmatprep.subr.mxu0 0.0
        %1869 = vmatpush1.msra.mxu0 %v1843
        %1870 = vmatprep.subr.mxu0 0.0
        %1871 = vmatpush1.msra.mxu0 %v1844
        %1872 = vmatprep.subr.mxu0 0.0
        %1873 = vmatpush1.msra.mxu0 %v1845
        %1874 = vmatprep.subr.mxu0 0.0
        %1875 = vmatpush1.msra.mxu0 %v1846
        %1876 = vmatprep.subr.mxu0 0.0
        %1877 = vmatpush1.msra.mxu0 %v1847
        %1878 = vmatprep.subr.mxu0 0.0
        %1879 = vmatpush1.msra.mxu0 %v1848
        %1880 = vmatprep.subr.mxu0 0.0
        %1881 = vmatpush1.msra.mxu0 %v1849
        %1882 = vmatprep.subr.mxu0 0.0
        %1883 = vmatpush1.msra.mxu0 0.0
        %1884 = vmatprep.subr.mxu0 0.0
        %1885 = vmatpush1.msra.mxu0 0.0
        %1886 = vmatprep.subr.mxu0 0.0
        %1887 = vmatpush1.msra.mxu0 0.0
        %1888 = vmatprep.subr.mxu0 0.0
        %1889 = vmatpush1.msra.mxu0 0.0
        %1890 = vmatprep.subr.mxu0 0.0
        %1891 = vmatpush1.msra.mxu0 0.0
        %1892 = vmatprep.subr.mxu0 0.0
        %1893 = vmatpush1.msra.mxu0 0.0
        %1894 = vmatprep.subr.mxu0 0.0
        %1895 = vmatpush1.msra.mxu0 0.0
        %1896 = vmatprep.subr.mxu0 0.0
        %1897 = vmatpush1.msra.mxu0 0.0
        %1898 = vmatprep.subr.mxu0 0.0
        %1899 = vmatpush1.msra.mxu0 0.0
        %1900 = vmatprep.subr.mxu0 0.0
        %1901 = vmatpush1.msra.mxu0 0.0
        %1902 = vmatprep.subr.mxu0 0.0
        %1903 = vmatpush1.msra.mxu0 0.0
        %1904 = vmatprep.subr.mxu0 0.0
        %1905 = vmatpush1.msra.mxu0 0.0
        %1906 = vmatprep.subr.mxu0 0.0
        %1907 = vmatpush1.msra.mxu0 0.0
        %1908 = vmatprep.subr.mxu0 0.0
        %1909 = vmatpush1.msra.mxu0 0.0
        %1910 = vmatprep.subr.mxu0 0.0
        %1911 = vmatpush1.msra.mxu0 0.0
        %1912 = vmatprep.subr.mxu0 0.0
        %1913 = vmatpush1.msra.mxu0 0.0
        %1914 = vmatprep.mubr.f32.mxu0 0.0
        %1915 = vmatmul.mubr.f32.gmra.mrb[0].mxu0 %v1830
        %v1916 = vpop.f32.mrb[0].mxu0
        %v1917 = vadd.f32 0.0, %v1916
        %v1918 = vpop.f32.mrb[0].mxu0
        %1919 = vmatprep.mubr.f32.mxu0 0.0
        %1920 = vmatmul.mubr.f32.gmra.mrb[0].mxu0 %v1831
        %v1921 = vpop.f32.mrb[0].mxu0
        %v1922 = vadd.f32 0.0, %v1921
        %v1923 = vpop.f32.mrb[0].mxu0
        %1924 = vdwg.mxu0
        %v1925 = vadd.f32 %v1832, %v1917
        %v1926 = vadd.f32 %v1833, %v1922
        %1927 = vst.msk [vmem:[#allocation4] sm:$0xff] %vm784, %v1925
        %1928 = vst.msk [vmem:[#allocation4 + $0x8] sm:$0xff] %vm784, %v1926
        %p1929 = scmp.eq.s32.totalorder %s31, 1
        // Predicated region
        $region81: #{tpu_custom_call.1} parent=75 // pred_check
          %p1930 = pneg %p1929
        $region82: #{tpu_custom_call.1} parent=75 // pred_check_branch
          %1932 = sbr.rel (%p1930) target = $region84
        $region83: #{tpu_custom_call.1} parent=75 // pred_region
          %v1933 = vld [vmem:[#allocation4] sm:$0xff]
          %v1934 = vld [vmem:[#allocation4 + $0x8] sm:$0xff]
          %v1935 = vld [vmem:[%s13] sm:$0x1]
          %v1937 = vlaneseq
          %v1938 = vshrl.u32 %v1937, 7
          %v1939 = vsub.s32 0, %v1938
          %v1940 = vrot.slane %v1935, %v1939
          %v1942 = vadd.f32 %v1933, %v1940
          %v1943 = vadd.f32 %v1934, %v1940
          %1944 = vst.msk [vmem:[#allocation5] sm:$0xff] %vm784, %v1942
          %1945 = vst.msk [vmem:[#allocation5 + $0x8] sm:$0xff] %vm784, %v1943
        $region84: #{tpu_custom_call.1} parent=75 // pred_fallthru
          _
        // Predicated region
        $region85: #{tpu_custom_call.1} parent=75 // pred_check
          %p1946 = pneg %p395
        $region86: #{tpu_custom_call.1} parent=75 // pred_check_branch
          %1948 = sbr.rel (%p1946) target = $region88
        $region87: #{tpu_custom_call.1} parent=75 // pred_region
          %s1949 = smul.u32 2, %s30
          %s1951 = ssub.s32 256, 256
          %1952 = vsyncadd [#allocation6], %s1951
          %s1953 = smul.addr %s1949, 128
          %s1954 = scalar_lea.hbm %s14, %s1953
          %s1955 = sshll.u32 [#allocation5], 4
          %s1956 = int_to_ptr.vmem [resolvable:$true] %s1955
          %1961 = dma.vmem_to_hbm [thread:$0]  %s1956, 256, %s1954, [#allocation6], 128, 128, 8
        $region88: #{tpu_custom_call.1} parent=75 // pred_fallthru
          _
        // Predicated region
        $region89: #{tpu_custom_call.1} parent=75 // pred_check
          %p1962 = pneg %p395
        $region90: #{tpu_custom_call.1} parent=75 // pred_check_branch
          %1964 = sbr.rel (%p1962) target = $region92
        $region91: #{tpu_custom_call.1} parent=75 // pred_region
          %1965 = dma.done [#allocation6], 256
        $region92: #{tpu_custom_call.1} parent=75 // pred_fallthru
          _
      $region76: #{tpu_custom_call.1} parent=5 // pred_fallthru
        _
      %p1966 = scmp.le.s32.totalorder 2, %s21
      // Predicated region
      $region93: #{tpu_custom_call.1} parent=5 // pred_check
        %p1967 = pneg %p1966
      $region94: #{tpu_custom_call.1} parent=5 // pred_check_branch
        %1969 = sbr.rel (%p1967) target = $region96
      $region95: #{tpu_custom_call.1} parent=5 // pred_region
        %s1970 = ssub.s32 %s21, 2
      $region96: #{tpu_custom_call.1} parent=5 // pred_fallthru
        _
    $region6: #{tpu_custom_call.1} parent=1 // loop_footer
      %s25 = sadd.s32 1, %s21
    $region7: #{tpu_custom_call.1} parent=1 // loop_footer_branch
      %20 = sbr.rel target = $region3
    $region8: #{tpu_custom_call.1} parent=1 // loop_exit
      _
    %1971 = vsyncpa [#allocation6], 1
    %s1972 = scalar_lea.sflag [#allocation6], 1
    %1973 = vsyncpa %s1972, 1

</llo_original>
